<compile_context>
chip_gen: v6e
topology: v6e:2x2x1
jax: 0.10.0
libtpu: 0.0.40
codegen_flags: <defaults>
</compile_context>

<pallas_src>
import jax
import jax.numpy as jnp
from jax.experimental import pallas as pl
from jax.experimental.pallas import tpu as pltpu

SPLIT_SIZES = (13, 3, 120, 16, 84, 48)   # sum = 284 = required input channels
SELECTED = (0, 2, 3, 5)                  # sections kept by the forward pass


def _offsets(sizes):
    offs = [0]
    for s in sizes:
        offs.append(offs[-1] + s)
    return offs


_IN_OFFS = _offsets(SPLIT_SIZES)
C_IN = sum(SPLIT_SIZES)                          # 284
C_OUT = sum(SPLIT_SIZES[i] for i in SELECTED)    # 197

# Clamped final split sizes of the concatenation: [13, 3, 120, 16, 45, 0].
# Each non-empty piece maps back onto contiguous channel ranges of v1:
#   f1 = v1[:,   0: 13]
#   f2 = v1[:,  16: 19]
#   f3 = v1[:,  19:139]
#   f4 = cat(v1[:, 139:152], v1[:, 236:239])
#   f5 = v1[:, 239:284]
PIECE_SIZES = (13, 3, 120, 16, 45)               # f6 is empty
PIECE_SRC = (
    ((0, 13),),
    ((16, 3),),
    ((19, 120),),
    ((139, 13), (236, 3)),
    ((239, 45),),
)
NUM_DMAS = sum(len(r) for r in PIECE_SRC)        # 6


# ---------------------------------------------------------------------------
# Primary path: pure HBM -> HBM DMA gather (no VMEM staging, no grid).
# ---------------------------------------------------------------------------
def _gather_dma_kernel(x_ref, f1_ref, f2_ref, f3_ref, f4_ref, f5_ref, sem):
    """x_ref: (N, C_IN, H, W) in HBM; f*_ref: (N, s_i, H, W) in HBM.

    All slice bounds are static; each copy slices only the channel dim
    (an outer, non-tiled dim), so every DMA is a plain strided copy.
    All 6 DMAs are started first (they run concurrently on the DMA engines)
    and then waited.
    """
    out_refs = (f1_ref, f2_ref, f3_ref, f4_ref, f5_ref)
    copies = []
    idx = 0
    for o_ref, ranges in zip(out_refs, PIECE_SRC):
        dst = 0
        for src, size in ranges:
            cp = pltpu.make_async_copy(
                x_ref.at[:, src:src + size, :, :],
                o_ref.at[:, dst:dst + size, :, :],
                sem.at[idx])
            cp.start()
            copies.append(cp)
            dst += size
            idx += 1
    for cp in copies:
        cp.wait()


def _forward_dma(v1):
    n, _, h, w = v1.shape
    out_shapes = tuple(jax.ShapeDtypeStruct((n, s, h, w), v1.dtype)
                       for s in PIECE_SIZES)
    return pl.pallas_call(
        _gather_dma_kernel,
        out_shape=out_shapes,
        in_specs=[pl.BlockSpec(memory_space=pl.ANY)],
        out_specs=tuple(pl.BlockSpec(memory_space=pl.ANY)
                        for _ in PIECE_SIZES),
        scratch_shapes=[pltpu.SemaphoreType.DMA((NUM_DMAS,))],
    )(v1)


# ---------------------------------------------------------------------------
# Fallback path: BlockSpec-pipelined VMEM copy over a batch grid.
# (Only used if the HBM->HBM DMA path fails to lower on this backend.)
# ---------------------------------------------------------------------------
def _gather_copy_kernel(x_ref, f1_ref, f2_ref, f3_ref, f4_ref, f5_ref):
    """x_ref: (1, C_IN, H, W) VMEM tile; f*_ref: (1, s_i, H, W) VMEM tiles.

    Channel slicing is on an outer (non-sublane) dim of the 4-D VMEM tiles,
    so these are plain full-width vector copies (no sublane realignment).
    """
    out_refs = (f1_ref, f2_ref, f3_ref, f4_ref, f5_ref)
    for o_ref, ranges in zip(out_refs, PIECE_SRC):
        dst = 0
        for src, size in ranges:
            o_ref[:, dst:dst + size, :, :] = x_ref[:, src:src + size, :, :]
            dst += size


def _forward_blockspec(v1):
    n, _, h, w = v1.shape
    out_shapes = tuple(jax.ShapeDtypeStruct((n, s, h, w), v1.dtype)
                       for s in PIECE_SIZES)
    return pl.pallas_call(
        _gather_copy_kernel,
        out_shape=out_shapes,
        grid=(n,),
        in_specs=[pl.BlockSpec((1, C_IN, h, w), lambda b: (b, 0, 0, 0))],
        out_specs=tuple(pl.BlockSpec((1, s, h, w), lambda b: (b, 0, 0, 0))
                        for s in PIECE_SIZES),
        compiler_params=pltpu.CompilerParams(
            dimension_semantics=("parallel",)),
    )(v1)


def model_forward(v1):
    n, c, h, w = v1.shape
    assert c == C_IN, f"expected {C_IN} channels, got {c}"
    try:
        pieces = _forward_dma(v1)
    except Exception:  # lowering fallback; keeps semantics identical
        pieces = _forward_blockspec(v1)
    f1, f2, f3, f4, f5 = pieces
    # TODO(synk): original `torch.split(concatenated, split_sizes=[13,3,120,16,84,48])`
    # is invalid PyTorch (bad kwarg name, sizes sum 284 != 197 channels); we
    # clamp to [13, 3, 120, 16, 45, 0], so f6 is an empty (n, 0, h, w) tensor.
    f6 = jnp.zeros((n, 0, h, w), dtype=v1.dtype)
    return f1, [f2, f3, f4, f5, f6]


if __name__ == "__main__":
    key = jax.random.PRNGKey(0)
    # Channel count is fixed at 284 by the split sizes; small batch/spatial.
    # w = 128 keeps the minor dim lane-dense (no padded HBM tiles).
    v1 = jax.random.normal(key, (2, C_IN, 8, 128), dtype=jnp.float32)

    f1, rest = model_forward(v1)
    outs = [f1] + rest
    outs = jax.block_until_ready(outs)

    # Reference: split -> select(0,2,3,5) -> cat -> clamped split, in plain JAX.
    sections = [v1[:, _IN_OFFS[i]:_IN_OFFS[i + 1]] for i in range(len(SPLIT_SIZES))]
    ref_cat = jnp.concatenate([sections[i] for i in SELECTED], axis=1)
    ref_pieces = []
    off = 0
    for s in SPLIT_SIZES:
        take = min(s, max(0, C_OUT - off))
        ref_pieces.append(ref_cat[:, off:off + take])
        off += take

    assert [o.shape[1] for o in outs] == [13, 3, 120, 16, 45, 0]
    for got, ref in zip(outs, ref_pieces):
        assert got.shape == ref.shape, (got.shape, ref.shape)
        if ref.shape[1]:
            assert jnp.array_equal(got, ref), "mismatch vs reference"

    print("KERNEL_OK")
</pallas_src>

<mosaic_0001>
module attributes {stable_mosaic.version = 11 : i64} {
  func.func @_gather_dma_kernel(%arg0: memref<2x284x8x128xf32, #tpu.memory_space<any>>, %arg1: memref<2x13x8x128xf32, #tpu.memory_space<any>>, %arg2: memref<2x3x8x128xf32, #tpu.memory_space<any>>, %arg3: memref<2x120x8x128xf32, #tpu.memory_space<any>>, %arg4: memref<2x16x8x128xf32, #tpu.memory_space<any>>, %arg5: memref<2x45x8x128xf32, #tpu.memory_space<any>>, %arg6: memref<6x!tpu.dma_semaphore, #tpu.memory_space<semaphore_mem>>) attributes {dimension_semantics = [], scalar_prefetch = 0 : i64, scratch_operands = 1 : i64, tpu.core_type = #tpu.core_type<tc>} {
    %c0_i32 = arith.constant 0 : i32
    %c0_i32_0 = arith.constant 0 : i32
    %c0_i32_1 = arith.constant 0 : i32
    %c0_i32_2 = arith.constant 0 : i32
    %c0_i32_3 = arith.constant 0 : i32
    %0 = tpu.memref_slice %arg0[%c0_i32_0, %c0_i32_1, %c0_i32_2, %c0_i32_3] : memref<2x284x8x128xf32, #tpu.memory_space<any>> -> memref<2x13x8x128xf32, #tpu.memory_space<any>>
    %c0_i32_4 = arith.constant 0 : i32
    %c0_i32_5 = arith.constant 0 : i32
    %c0_i32_6 = arith.constant 0 : i32
    %c0_i32_7 = arith.constant 0 : i32
    %1 = tpu.memref_slice %arg1[%c0_i32_4, %c0_i32_5, %c0_i32_6, %c0_i32_7] : memref<2x13x8x128xf32, #tpu.memory_space<any>> -> memref<2x13x8x128xf32, #tpu.memory_space<any>>
    %2 = tpu.memref_slice %arg6[%c0_i32] : memref<6x!tpu.dma_semaphore, #tpu.memory_space<semaphore_mem>> -> memref<1x!tpu.dma_semaphore, #tpu.memory_space<semaphore_mem>>
    %3 = tpu.memref_squeeze %2 : memref<1x!tpu.dma_semaphore, #tpu.memory_space<semaphore_mem>> -> memref<!tpu.dma_semaphore, #tpu.memory_space<semaphore_mem>>
    tpu.enqueue_dma source(%0 : memref<2x13x8x128xf32, #tpu.memory_space<any>>) target(%1 : memref<2x13x8x128xf32, #tpu.memory_space<any>>) target_semaphore(%3 : memref<!tpu.dma_semaphore, #tpu.memory_space<semaphore_mem>>)
    %c1_i32 = arith.constant 1 : i32
    %c0_i32_8 = arith.constant 0 : i32
    %c16_i32 = arith.constant 16 : i32
    %c0_i32_9 = arith.constant 0 : i32
    %c0_i32_10 = arith.constant 0 : i32
    %4 = tpu.memref_slice %arg0[%c0_i32_8, %c16_i32, %c0_i32_9, %c0_i32_10] : memref<2x284x8x128xf32, #tpu.memory_space<any>> -> memref<2x3x8x128xf32, #tpu.memory_space<any>>
    %c0_i32_11 = arith.constant 0 : i32
    %c0_i32_12 = arith.constant 0 : i32
    %c0_i32_13 = arith.constant 0 : i32
    %c0_i32_14 = arith.constant 0 : i32
    %5 = tpu.memref_slice %arg2[%c0_i32_11, %c0_i32_12, %c0_i32_13, %c0_i32_14] : memref<2x3x8x128xf32, #tpu.memory_space<any>> -> memref<2x3x8x128xf32, #tpu.memory_space<any>>
    %6 = tpu.memref_slice %arg6[%c1_i32] : memref<6x!tpu.dma_semaphore, #tpu.memory_space<semaphore_mem>> -> memref<1x!tpu.dma_semaphore, #tpu.memory_space<semaphore_mem>>
    %7 = tpu.memref_squeeze %6 : memref<1x!tpu.dma_semaphore, #tpu.memory_space<semaphore_mem>> -> memref<!tpu.dma_semaphore, #tpu.memory_space<semaphore_mem>>
    tpu.enqueue_dma source(%4 : memref<2x3x8x128xf32, #tpu.memory_space<any>>) target(%5 : memref<2x3x8x128xf32, #tpu.memory_space<any>>) target_semaphore(%7 : memref<!tpu.dma_semaphore, #tpu.memory_space<semaphore_mem>>)
    %c2_i32 = arith.constant 2 : i32
    %c0_i32_15 = arith.constant 0 : i32
    %c19_i32 = arith.constant 19 : i32
    %c0_i32_16 = arith.constant 0 : i32
    %c0_i32_17 = arith.constant 0 : i32
    %8 = tpu.memref_slice %arg0[%c0_i32_15, %c19_i32, %c0_i32_16, %c0_i32_17] : memref<2x284x8x128xf32, #tpu.memory_space<any>> -> memref<2x120x8x128xf32, #tpu.memory_space<any>>
    %c0_i32_18 = arith.constant 0 : i32
    %c0_i32_19 = arith.constant 0 : i32
    %c0_i32_20 = arith.constant 0 : i32
    %c0_i32_21 = arith.constant 0 : i32
    %9 = tpu.memref_slice %arg3[%c0_i32_18, %c0_i32_19, %c0_i32_20, %c0_i32_21] : memref<2x120x8x128xf32, #tpu.memory_space<any>> -> memref<2x120x8x128xf32, #tpu.memory_space<any>>
    %10 = tpu.memref_slice %arg6[%c2_i32] : memref<6x!tpu.dma_semaphore, #tpu.memory_space<semaphore_mem>> -> memref<1x!tpu.dma_semaphore, #tpu.memory_space<semaphore_mem>>
    %11 = tpu.memref_squeeze %10 : memref<1x!tpu.dma_semaphore, #tpu.memory_space<semaphore_mem>> -> memref<!tpu.dma_semaphore, #tpu.memory_space<semaphore_mem>>
    tpu.enqueue_dma source(%8 : memref<2x120x8x128xf32, #tpu.memory_space<any>>) target(%9 : memref<2x120x8x128xf32, #tpu.memory_space<any>>) target_semaphore(%11 : memref<!tpu.dma_semaphore, #tpu.memory_space<semaphore_mem>>)
    %c3_i32 = arith.constant 3 : i32
    %c0_i32_22 = arith.constant 0 : i32
    %c139_i32 = arith.constant 139 : i32
    %c0_i32_23 = arith.constant 0 : i32
    %c0_i32_24 = arith.constant 0 : i32
    %12 = tpu.memref_slice %arg0[%c0_i32_22, %c139_i32, %c0_i32_23, %c0_i32_24] : memref<2x284x8x128xf32, #tpu.memory_space<any>> -> memref<2x13x8x128xf32, #tpu.memory_space<any>>
    %c0_i32_25 = arith.constant 0 : i32
    %c0_i32_26 = arith.constant 0 : i32
    %c0_i32_27 = arith.constant 0 : i32
    %c0_i32_28 = arith.constant 0 : i32
    %13 = tpu.memref_slice %arg4[%c0_i32_25, %c0_i32_26, %c0_i32_27, %c0_i32_28] : memref<2x16x8x128xf32, #tpu.memory_space<any>> -> memref<2x13x8x128xf32, #tpu.memory_space<any>>
    %14 = tpu.memref_slice %arg6[%c3_i32] : memref<6x!tpu.dma_semaphore, #tpu.memory_space<semaphore_mem>> -> memref<1x!tpu.dma_semaphore, #tpu.memory_space<semaphore_mem>>
    %15 = tpu.memref_squeeze %14 : memref<1x!tpu.dma_semaphore, #tpu.memory_space<semaphore_mem>> -> memref<!tpu.dma_semaphore, #tpu.memory_space<semaphore_mem>>
    tpu.enqueue_dma source(%12 : memref<2x13x8x128xf32, #tpu.memory_space<any>>) target(%13 : memref<2x13x8x128xf32, #tpu.memory_space<any>>) target_semaphore(%15 : memref<!tpu.dma_semaphore, #tpu.memory_space<semaphore_mem>>)
    %c4_i32 = arith.constant 4 : i32
    %c0_i32_29 = arith.constant 0 : i32
    %c236_i32 = arith.constant 236 : i32
    %c0_i32_30 = arith.constant 0 : i32
    %c0_i32_31 = arith.constant 0 : i32
    %16 = tpu.memref_slice %arg0[%c0_i32_29, %c236_i32, %c0_i32_30, %c0_i32_31] : memref<2x284x8x128xf32, #tpu.memory_space<any>> -> memref<2x3x8x128xf32, #tpu.memory_space<any>>
    %c0_i32_32 = arith.constant 0 : i32
    %c13_i32 = arith.constant 13 : i32
    %c0_i32_33 = arith.constant 0 : i32
    %c0_i32_34 = arith.constant 0 : i32
    %17 = tpu.memref_slice %arg4[%c0_i32_32, %c13_i32, %c0_i32_33, %c0_i32_34] : memref<2x16x8x128xf32, #tpu.memory_space<any>> -> memref<2x3x8x128xf32, #tpu.memory_space<any>>
    %18 = tpu.memref_slice %arg6[%c4_i32] : memref<6x!tpu.dma_semaphore, #tpu.memory_space<semaphore_mem>> -> memref<1x!tpu.dma_semaphore, #tpu.memory_space<semaphore_mem>>
    %19 = tpu.memref_squeeze %18 : memref<1x!tpu.dma_semaphore, #tpu.memory_space<semaphore_mem>> -> memref<!tpu.dma_semaphore, #tpu.memory_space<semaphore_mem>>
    tpu.enqueue_dma source(%16 : memref<2x3x8x128xf32, #tpu.memory_space<any>>) target(%17 : memref<2x3x8x128xf32, #tpu.memory_space<any>>) target_semaphore(%19 : memref<!tpu.dma_semaphore, #tpu.memory_space<semaphore_mem>>)
    %c5_i32 = arith.constant 5 : i32
    %c0_i32_35 = arith.constant 0 : i32
    %c239_i32 = arith.constant 239 : i32
    %c0_i32_36 = arith.constant 0 : i32
    %c0_i32_37 = arith.constant 0 : i32
    %20 = tpu.memref_slice %arg0[%c0_i32_35, %c239_i32, %c0_i32_36, %c0_i32_37] : memref<2x284x8x128xf32, #tpu.memory_space<any>> -> memref<2x45x8x128xf32, #tpu.memory_space<any>>
    %c0_i32_38 = arith.constant 0 : i32
    %c0_i32_39 = arith.constant 0 : i32
    %c0_i32_40 = arith.constant 0 : i32
    %c0_i32_41 = arith.constant 0 : i32
    %21 = tpu.memref_slice %arg5[%c0_i32_38, %c0_i32_39, %c0_i32_40, %c0_i32_41] : memref<2x45x8x128xf32, #tpu.memory_space<any>> -> memref<2x45x8x128xf32, #tpu.memory_space<any>>
    %22 = tpu.memref_slice %arg6[%c5_i32] : memref<6x!tpu.dma_semaphore, #tpu.memory_space<semaphore_mem>> -> memref<1x!tpu.dma_semaphore, #tpu.memory_space<semaphore_mem>>
    %23 = tpu.memref_squeeze %22 : memref<1x!tpu.dma_semaphore, #tpu.memory_space<semaphore_mem>> -> memref<!tpu.dma_semaphore, #tpu.memory_space<semaphore_mem>>
    tpu.enqueue_dma source(%20 : memref<2x45x8x128xf32, #tpu.memory_space<any>>) target(%21 : memref<2x45x8x128xf32, #tpu.memory_space<any>>) target_semaphore(%23 : memref<!tpu.dma_semaphore, #tpu.memory_space<semaphore_mem>>)
    %c0_i32_42 = arith.constant 0 : i32
    %c0_i32_43 = arith.constant 0 : i32
    %c0_i32_44 = arith.constant 0 : i32
    %c0_i32_45 = arith.constant 0 : i32
    %c0_i32_46 = arith.constant 0 : i32
    %24 = tpu.memref_slice %arg0[%c0_i32_43, %c0_i32_44, %c0_i32_45, %c0_i32_46] : memref<2x284x8x128xf32, #tpu.memory_space<any>> -> memref<2x13x8x128xf32, #tpu.memory_space<any>>
    %c0_i32_47 = arith.constant 0 : i32
    %c0_i32_48 = arith.constant 0 : i32
    %c0_i32_49 = arith.constant 0 : i32
    %c0_i32_50 = arith.constant 0 : i32
    %25 = tpu.memref_slice %arg1[%c0_i32_47, %c0_i32_48, %c0_i32_49, %c0_i32_50] : memref<2x13x8x128xf32, #tpu.memory_space<any>> -> memref<2x13x8x128xf32, #tpu.memory_space<any>>
    %26 = tpu.memref_slice %arg6[%c0_i32_42] : memref<6x!tpu.dma_semaphore, #tpu.memory_space<semaphore_mem>> -> memref<1x!tpu.dma_semaphore, #tpu.memory_space<semaphore_mem>>
    %27 = tpu.memref_squeeze %26 : memref<1x!tpu.dma_semaphore, #tpu.memory_space<semaphore_mem>> -> memref<!tpu.dma_semaphore, #tpu.memory_space<semaphore_mem>>
    tpu.wait_dma2 semaphore(%27 : memref<!tpu.dma_semaphore, #tpu.memory_space<semaphore_mem>>) src(%24 : memref<2x13x8x128xf32, #tpu.memory_space<any>>) dst(%25 : memref<2x13x8x128xf32, #tpu.memory_space<any>>)
    %c1_i32_51 = arith.constant 1 : i32
    %c0_i32_52 = arith.constant 0 : i32
    %c16_i32_53 = arith.constant 16 : i32
    %c0_i32_54 = arith.constant 0 : i32
    %c0_i32_55 = arith.constant 0 : i32
    %28 = tpu.memref_slice %arg0[%c0_i32_52, %c16_i32_53, %c0_i32_54, %c0_i32_55] : memref<2x284x8x128xf32, #tpu.memory_space<any>> -> memref<2x3x8x128xf32, #tpu.memory_space<any>>
    %c0_i32_56 = arith.constant 0 : i32
    %c0_i32_57 = arith.constant 0 : i32
    %c0_i32_58 = arith.constant 0 : i32
    %c0_i32_59 = arith.constant 0 : i32
    %29 = tpu.memref_slice %arg2[%c0_i32_56, %c0_i32_57, %c0_i32_58, %c0_i32_59] : memref<2x3x8x128xf32, #tpu.memory_space<any>> -> memref<2x3x8x128xf32, #tpu.memory_space<any>>
    %30 = tpu.memref_slice %arg6[%c1_i32_51] : memref<6x!tpu.dma_semaphore, #tpu.memory_space<semaphore_mem>> -> memref<1x!tpu.dma_semaphore, #tpu.memory_space<semaphore_mem>>
    %31 = tpu.memref_squeeze %30 : memref<1x!tpu.dma_semaphore, #tpu.memory_space<semaphore_mem>> -> memref<!tpu.dma_semaphore, #tpu.memory_space<semaphore_mem>>
    tpu.wait_dma2 semaphore(%31 : memref<!tpu.dma_semaphore, #tpu.memory_space<semaphore_mem>>) src(%28 : memref<2x3x8x128xf32, #tpu.memory_space<any>>) dst(%29 : memref<2x3x8x128xf32, #tpu.memory_space<any>>)
    %c2_i32_60 = arith.constant 2 : i32
    %c0_i32_61 = arith.constant 0 : i32
    %c19_i32_62 = arith.constant 19 : i32
    %c0_i32_63 = arith.constant 0 : i32
    %c0_i32_64 = arith.constant 0 : i32
    %32 = tpu.memref_slice %arg0[%c0_i32_61, %c19_i32_62, %c0_i32_63, %c0_i32_64] : memref<2x284x8x128xf32, #tpu.memory_space<any>> -> memref<2x120x8x128xf32, #tpu.memory_space<any>>
    %c0_i32_65 = arith.constant 0 : i32
    %c0_i32_66 = arith.constant 0 : i32
    %c0_i32_67 = arith.constant 0 : i32
    %c0_i32_68 = arith.constant 0 : i32
    %33 = tpu.memref_slice %arg3[%c0_i32_65, %c0_i32_66, %c0_i32_67, %c0_i32_68] : memref<2x120x8x128xf32, #tpu.memory_space<any>> -> memref<2x120x8x128xf32, #tpu.memory_space<any>>
    %34 = tpu.memref_slice %arg6[%c2_i32_60] : memref<6x!tpu.dma_semaphore, #tpu.memory_space<semaphore_mem>> -> memref<1x!tpu.dma_semaphore, #tpu.memory_space<semaphore_mem>>
    %35 = tpu.memref_squeeze %34 : memref<1x!tpu.dma_semaphore, #tpu.memory_space<semaphore_mem>> -> memref<!tpu.dma_semaphore, #tpu.memory_space<semaphore_mem>>
    tpu.wait_dma2 semaphore(%35 : memref<!tpu.dma_semaphore, #tpu.memory_space<semaphore_mem>>) src(%32 : memref<2x120x8x128xf32, #tpu.memory_space<any>>) dst(%33 : memref<2x120x8x128xf32, #tpu.memory_space<any>>)
    %c3_i32_69 = arith.constant 3 : i32
    %c0_i32_70 = arith.constant 0 : i32
    %c139_i32_71 = arith.constant 139 : i32
    %c0_i32_72 = arith.constant 0 : i32
    %c0_i32_73 = arith.constant 0 : i32
    %36 = tpu.memref_slice %arg0[%c0_i32_70, %c139_i32_71, %c0_i32_72, %c0_i32_73] : memref<2x284x8x128xf32, #tpu.memory_space<any>> -> memref<2x13x8x128xf32, #tpu.memory_space<any>>
    %c0_i32_74 = arith.constant 0 : i32
    %c0_i32_75 = arith.constant 0 : i32
    %c0_i32_76 = arith.constant 0 : i32
    %c0_i32_77 = arith.constant 0 : i32
    %37 = tpu.memref_slice %arg4[%c0_i32_74, %c0_i32_75, %c0_i32_76, %c0_i32_77] : memref<2x16x8x128xf32, #tpu.memory_space<any>> -> memref<2x13x8x128xf32, #tpu.memory_space<any>>
    %38 = tpu.memref_slice %arg6[%c3_i32_69] : memref<6x!tpu.dma_semaphore, #tpu.memory_space<semaphore_mem>> -> memref<1x!tpu.dma_semaphore, #tpu.memory_space<semaphore_mem>>
    %39 = tpu.memref_squeeze %38 : memref<1x!tpu.dma_semaphore, #tpu.memory_space<semaphore_mem>> -> memref<!tpu.dma_semaphore, #tpu.memory_space<semaphore_mem>>
    tpu.wait_dma2 semaphore(%39 : memref<!tpu.dma_semaphore, #tpu.memory_space<semaphore_mem>>) src(%36 : memref<2x13x8x128xf32, #tpu.memory_space<any>>) dst(%37 : memref<2x13x8x128xf32, #tpu.memory_space<any>>)
    %c4_i32_78 = arith.constant 4 : i32
    %c0_i32_79 = arith.constant 0 : i32
    %c236_i32_80 = arith.constant 236 : i32
    %c0_i32_81 = arith.constant 0 : i32
    %c0_i32_82 = arith.constant 0 : i32
    %40 = tpu.memref_slice %arg0[%c0_i32_79, %c236_i32_80, %c0_i32_81, %c0_i32_82] : memref<2x284x8x128xf32, #tpu.memory_space<any>> -> memref<2x3x8x128xf32, #tpu.memory_space<any>>
    %c0_i32_83 = arith.constant 0 : i32
    %c13_i32_84 = arith.constant 13 : i32
    %c0_i32_85 = arith.constant 0 : i32
    %c0_i32_86 = arith.constant 0 : i32
    %41 = tpu.memref_slice %arg4[%c0_i32_83, %c13_i32_84, %c0_i32_85, %c0_i32_86] : memref<2x16x8x128xf32, #tpu.memory_space<any>> -> memref<2x3x8x128xf32, #tpu.memory_space<any>>
    %42 = tpu.memref_slice %arg6[%c4_i32_78] : memref<6x!tpu.dma_semaphore, #tpu.memory_space<semaphore_mem>> -> memref<1x!tpu.dma_semaphore, #tpu.memory_space<semaphore_mem>>
    %43 = tpu.memref_squeeze %42 : memref<1x!tpu.dma_semaphore, #tpu.memory_space<semaphore_mem>> -> memref<!tpu.dma_semaphore, #tpu.memory_space<semaphore_mem>>
    tpu.wait_dma2 semaphore(%43 : memref<!tpu.dma_semaphore, #tpu.memory_space<semaphore_mem>>) src(%40 : memref<2x3x8x128xf32, #tpu.memory_space<any>>) dst(%41 : memref<2x3x8x128xf32, #tpu.memory_space<any>>)
    %c5_i32_87 = arith.constant 5 : i32
    %c0_i32_88 = arith.constant 0 : i32
    %c239_i32_89 = arith.constant 239 : i32
    %c0_i32_90 = arith.constant 0 : i32
    %c0_i32_91 = arith.constant 0 : i32
    %44 = tpu.memref_slice %arg0[%c0_i32_88, %c239_i32_89, %c0_i32_90, %c0_i32_91] : memref<2x284x8x128xf32, #tpu.memory_space<any>> -> memref<2x45x8x128xf32, #tpu.memory_space<any>>
    %c0_i32_92 = arith.constant 0 : i32
    %c0_i32_93 = arith.constant 0 : i32
    %c0_i32_94 = arith.constant 0 : i32
    %c0_i32_95 = arith.constant 0 : i32
    %45 = tpu.memref_slice %arg5[%c0_i32_92, %c0_i32_93, %c0_i32_94, %c0_i32_95] : memref<2x45x8x128xf32, #tpu.memory_space<any>> -> memref<2x45x8x128xf32, #tpu.memory_space<any>>
    %46 = tpu.memref_slice %arg6[%c5_i32_87] : memref<6x!tpu.dma_semaphore, #tpu.memory_space<semaphore_mem>> -> memref<1x!tpu.dma_semaphore, #tpu.memory_space<semaphore_mem>>
    %47 = tpu.memref_squeeze %46 : memref<1x!tpu.dma_semaphore, #tpu.memory_space<semaphore_mem>> -> memref<!tpu.dma_semaphore, #tpu.memory_space<semaphore_mem>>
    tpu.wait_dma2 semaphore(%47 : memref<!tpu.dma_semaphore, #tpu.memory_space<semaphore_mem>>) src(%44 : memref<2x45x8x128xf32, #tpu.memory_space<any>>) dst(%45 : memref<2x45x8x128xf32, #tpu.memory_space<any>>)
    return
  }
}

module attributes {stable_mosaic.version = 11 : i64} {
  func.func @_gather_copy_kernel(%arg0: i32, %arg1: memref<1x284x8x128xf32, #tpu.memory_space<vmem>>, %arg2: memref<1x13x8x128xf32, #tpu.memory_space<vmem>>, %arg3: memref<1x3x8x128xf32, #tpu.memory_space<vmem>>, %arg4: memref<1x120x8x128xf32, #tpu.memory_space<vmem>>, %arg5: memref<1x16x8x128xf32, #tpu.memory_space<vmem>>, %arg6: memref<1x45x8x128xf32, #tpu.memory_space<vmem>>) attributes {dimension_semantics = [#tpu.dimension_semantics<parallel>], iteration_bounds = array<i64: 2>, scalar_prefetch = 0 : i64, scratch_operands = 0 : i64, tpu.core_type = #tpu.core_type<tc>, window_params = [{transform_indices = @transform_0, window_bounds = array<i64: 1, 284, 8, 128>}, {transform_indices = @transform_1, window_bounds = array<i64: 1, 13, 8, 128>}, {transform_indices = @transform_2, window_bounds = array<i64: 1, 3, 8, 128>}, {transform_indices = @transform_3, window_bounds = array<i64: 1, 120, 8, 128>}, {transform_indices = @transform_4, window_bounds = array<i64: 1, 16, 8, 128>}, {transform_indices = @transform_5, window_bounds = array<i64: 1, 45, 8, 128>}]} {
    %c0 = arith.constant 0 : index
    %c0_0 = arith.constant 0 : index
    %c0_1 = arith.constant 0 : index
    %c0_2 = arith.constant 0 : index
    %0 = vector.load %arg1[%c0, %c0_0, %c0_1, %c0_2] : memref<1x284x8x128xf32, #tpu.memory_space<vmem>>, vector<1x13x8x128xf32>
    %c0_3 = arith.constant 0 : index
    %c0_4 = arith.constant 0 : index
    %c0_5 = arith.constant 0 : index
    %c0_6 = arith.constant 0 : index
    %1 = vector.load %arg2[%c0_3, %c0_4, %c0_5, %c0_6] : memref<1x13x8x128xf32, #tpu.memory_space<vmem>>, vector<1x13x8x128xf32>
    tpu.vector_store %arg2[%c0_3, %c0_4, %c0_5, %c0_6], %0 {strides = array<i32>} : memref<1x13x8x128xf32, #tpu.memory_space<vmem>>, vector<1x13x8x128xf32>,
    %c0_7 = arith.constant 0 : index
    %c16 = arith.constant 16 : index
    %c0_8 = arith.constant 0 : index
    %c0_9 = arith.constant 0 : index
    %2 = vector.load %arg1[%c0_7, %c16, %c0_8, %c0_9] : memref<1x284x8x128xf32, #tpu.memory_space<vmem>>, vector<1x3x8x128xf32>
    %c0_10 = arith.constant 0 : index
    %c0_11 = arith.constant 0 : index
    %c0_12 = arith.constant 0 : index
    %c0_13 = arith.constant 0 : index
    %3 = vector.load %arg3[%c0_10, %c0_11, %c0_12, %c0_13] : memref<1x3x8x128xf32, #tpu.memory_space<vmem>>, vector<1x3x8x128xf32>
    tpu.vector_store %arg3[%c0_10, %c0_11, %c0_12, %c0_13], %2 {strides = array<i32>} : memref<1x3x8x128xf32, #tpu.memory_space<vmem>>, vector<1x3x8x128xf32>,
    %c0_14 = arith.constant 0 : index
    %c19 = arith.constant 19 : index
    %c0_15 = arith.constant 0 : index
    %c0_16 = arith.constant 0 : index
    %4 = vector.load %arg1[%c0_14, %c19, %c0_15, %c0_16] : memref<1x284x8x128xf32, #tpu.memory_space<vmem>>, vector<1x120x8x128xf32>
    %c0_17 = arith.constant 0 : index
    %c0_18 = arith.constant 0 : index
    %c0_19 = arith.constant 0 : index
    %c0_20 = arith.constant 0 : index
    %5 = vector.load %arg4[%c0_17, %c0_18, %c0_19, %c0_20] : memref<1x120x8x128xf32, #tpu.memory_space<vmem>>, vector<1x120x8x128xf32>
    tpu.vector_store %arg4[%c0_17, %c0_18, %c0_19, %c0_20], %4 {strides = array<i32>} : memref<1x120x8x128xf32, #tpu.memory_space<vmem>>, vector<1x120x8x128xf32>,
    %c0_21 = arith.constant 0 : index
    %c139 = arith.constant 139 : index
    %c0_22 = arith.constant 0 : index
    %c0_23 = arith.constant 0 : index
    %6 = vector.load %arg1[%c0_21, %c139, %c0_22, %c0_23] : memref<1x284x8x128xf32, #tpu.memory_space<vmem>>, vector<1x13x8x128xf32>
    %c0_24 = arith.constant 0 : index
    %c0_25 = arith.constant 0 : index
    %c0_26 = arith.constant 0 : index
    %c0_27 = arith.constant 0 : index
    %7 = vector.load %arg5[%c0_24, %c0_25, %c0_26, %c0_27] : memref<1x16x8x128xf32, #tpu.memory_space<vmem>>, vector<1x13x8x128xf32>
    tpu.vector_store %arg5[%c0_24, %c0_25, %c0_26, %c0_27], %6 {strides = array<i32>} : memref<1x16x8x128xf32, #tpu.memory_space<vmem>>, vector<1x13x8x128xf32>,
    %c0_28 = arith.constant 0 : index
    %c236 = arith.constant 236 : index
    %c0_29 = arith.constant 0 : index
    %c0_30 = arith.constant 0 : index
    %8 = vector.load %arg1[%c0_28, %c236, %c0_29, %c0_30] : memref<1x284x8x128xf32, #tpu.memory_space<vmem>>, vector<1x3x8x128xf32>
    %c0_31 = arith.constant 0 : index
    %c13 = arith.constant 13 : index
    %c0_32 = arith.constant 0 : index
    %c0_33 = arith.constant 0 : index
    %9 = vector.load %arg5[%c0_31, %c13, %c0_32, %c0_33] : memref<1x16x8x128xf32, #tpu.memory_space<vmem>>, vector<1x3x8x128xf32>
    tpu.vector_store %arg5[%c0_31, %c13, %c0_32, %c0_33], %8 {strides = array<i32>} : memref<1x16x8x128xf32, #tpu.memory_space<vmem>>, vector<1x3x8x128xf32>,
    %c0_34 = arith.constant 0 : index
    %c239 = arith.constant 239 : index
    %c0_35 = arith.constant 0 : index
    %c0_36 = arith.constant 0 : index
    %10 = vector.load %arg1[%c0_34, %c239, %c0_35, %c0_36] : memref<1x284x8x128xf32, #tpu.memory_space<vmem>>, vector<1x45x8x128xf32>
    %c0_37 = arith.constant 0 : index
    %c0_38 = arith.constant 0 : index
    %c0_39 = arith.constant 0 : index
    %c0_40 = arith.constant 0 : index
    %11 = vector.load %arg6[%c0_37, %c0_38, %c0_39, %c0_40] : memref<1x45x8x128xf32, #tpu.memory_space<vmem>>, vector<1x45x8x128xf32>
    tpu.vector_store %arg6[%c0_37, %c0_38, %c0_39, %c0_40], %10 {strides = array<i32>} : memref<1x45x8x128xf32, #tpu.memory_space<vmem>>, vector<1x45x8x128xf32>,
    return
  }
  func.func @transform_0(%arg0: i32) -> (i32, i32, i32, i32) {
    %c0_i32 = arith.constant 0 : i32
    %c0_i32_0 = arith.constant 0 : i32
    %c0_i32_1 = arith.constant 0 : i32
    %c0_i32_2 = arith.constant 0 : i32
    return %arg0, %c0_i32, %c0_i32_0, %c0_i32_1 : i32, i32, i32, i32
  }
  func.func @transform_1(%arg0: i32) -> (i32, i32, i32, i32) {
    %c0_i32 = arith.constant 0 : i32
    %c0_i32_0 = arith.constant 0 : i32
    %c0_i32_1 = arith.constant 0 : i32
    %c0_i32_2 = arith.constant 0 : i32
    return %arg0, %c0_i32, %c0_i32_0, %c0_i32_1 : i32, i32, i32, i32
  }
  func.func @transform_2(%arg0: i32) -> (i32, i32, i32, i32) {
    %c0_i32 = arith.constant 0 : i32
    %c0_i32_0 = arith.constant 0 : i32
    %c0_i32_1 = arith.constant 0 : i32
    %c0_i32_2 = arith.constant 0 : i32
    return %arg0, %c0_i32, %c0_i32_0, %c0_i32_1 : i32, i32, i32, i32
  }
  func.func @transform_3(%arg0: i32) -> (i32, i32, i32, i32) {
    %c0_i32 = arith.constant 0 : i32
    %c0_i32_0 = arith.constant 0 : i32
    %c0_i32_1 = arith.constant 0 : i32
    %c0_i32_2 = arith.constant 0 : i32
    return %arg0, %c0_i32, %c0_i32_0, %c0_i32_1 : i32, i32, i32, i32
  }
  func.func @transform_4(%arg0: i32) -> (i32, i32, i32, i32) {
    %c0_i32 = arith.constant 0 : i32
    %c0_i32_0 = arith.constant 0 : i32
    %c0_i32_1 = arith.constant 0 : i32
    %c0_i32_2 = arith.constant 0 : i32
    return %arg0, %c0_i32, %c0_i32_0, %c0_i32_1 : i32, i32, i32, i32
  }
  func.func @transform_5(%arg0: i32) -> (i32, i32, i32, i32) {
    %c0_i32 = arith.constant 0 : i32
    %c0_i32_0 = arith.constant 0 : i32
    %c0_i32_1 = arith.constant 0 : i32
    %c0_i32_2 = arith.constant 0 : i32
    return %arg0, %c0_i32, %c0_i32_0, %c0_i32_1 : i32, i32, i32, i32
  }
}

</mosaic_0001>

<llo_original>
// kernel: tpu_custom_call.1
$region0: #{tpu_custom_call.1}
  #allocation0 [shape = 'u32[]', space=smem, size = 0x4, offset = 0x4, fixed_abs, tag = 'smem constant byte address 0x4 - core index']
  #allocation1 [shape = 'u32[144,128]{1,0:T(1,128)}', space=vmem, size = 0x12000, scoped, tag = 'internal scratch']
  #allocation2 [shape = 's32[6]{0}', space=sflag, size = 0x18, scoped, tag = 'scratch operand']
  #allocation3 [shape = 's32[]', space=sflag, size = 0x4, offset = 0, fixed_abs, tag = 'sflag constant byte address 0x0 - dummy sync flag']
  #allocation5 [shape = 's32[]', space=sflag, size = 0x4, offset = 0, fixed_abs, tag = 'sflag constant byte address 0x0 - dummy sync flag']
  #allocation7 [shape = 's32[]', space=sflag, size = 0x4, offset = 0, fixed_abs, tag = 'sflag constant byte address 0x0 - dummy sync flag']
  #allocation9 [shape = 's32[]', space=sflag, size = 0x4, offset = 0, fixed_abs, tag = 'sflag constant byte address 0x0 - dummy sync flag']
  #allocation11 [shape = 's32[]', space=sflag, size = 0x4, offset = 0, fixed_abs, tag = 'sflag constant byte address 0x0 - dummy sync flag']
  #allocation13 [shape = 's32[]', space=sflag, size = 0x4, offset = 0, fixed_abs, tag = 'sflag constant byte address 0x0 - dummy sync flag']
  %s0 = inlined_call_operand.hbm [shape: f32[2,284,8,128], index: 0, kind: input, shape index: {}]
  %s1 = inlined_call_operand.hbm [shape: f32[2,13,8,128], index: 1, kind: output, shape index: {0}]
  %s2 = inlined_call_operand.hbm [shape: f32[2,3,8,128], index: 2, kind: output, shape index: {1}]
  %s3 = inlined_call_operand.hbm [shape: f32[2,120,8,128], index: 3, kind: output, shape index: {2}]
  %s4 = inlined_call_operand.hbm [shape: f32[2,16,8,128], index: 4, kind: output, shape index: {3}]
  %s5 = inlined_call_operand.hbm [shape: f32[2,45,8,128], index: 5, kind: output, shape index: {4}]
  %6 = xla_tuple %s1, %s2, %s3, %s4, %s5
  %s7 = sld [smem:[#allocation0]]
  $region2: #{tpu_custom_call.1} parent=0
    _
  %s9 = ssub.s32 1, %s7
  %s10 = scalar_select 0, %s9, %s7
  $region1: #{tpu_custom_call.1} parent=0
    #allocation4 [shape = 'u32[3]{0}', space=smem, size = 0xc, scoped, tag = 'DMA stride descriptor']
    #allocation6 [shape = 'u32[3]{0}', space=smem, size = 0xc, scoped, tag = 'DMA stride descriptor']
    #allocation8 [shape = 'u32[3]{0}', space=smem, size = 0xc, scoped, tag = 'DMA stride descriptor']
    #allocation10 [shape = 'u32[3]{0}', space=smem, size = 0xc, scoped, tag = 'DMA stride descriptor']
    #allocation12 [shape = 'u32[3]{0}', space=smem, size = 0xc, scoped, tag = 'DMA stride descriptor']
    #allocation14 [shape = 'u32[3]{0}', space=smem, size = 0xc, scoped, tag = 'DMA stride descriptor']
    %s12 = sshll.u32 1, 14
    %s13 = sxor.u32 4294967295, %s12
    %17 = sst [smem:[#allocation4]] 36352
    %s18 = scalar_lea.smem [#allocation4], 1
    %19 = sst [smem:[%s18]] 1664
    %s20 = scalar_lea.smem [#allocation4], 2
    %21 = sst [smem:[%s20]] 104
    %23 = dma.general %s0, 3328, %s1, [#allocation2], 131072, [#allocation4], 0, 0
    %s24 = scalar_lea.hbm %s0, 2048
    %s25 = scalar_lea.sflag [#allocation2], 1
    %s27 = sshll.u32 1, 14
    %s28 = sxor.u32 4294967295, %s27
    %32 = sst [smem:[#allocation6]] 36352
    %s33 = scalar_lea.smem [#allocation6], 1
    %34 = sst [smem:[%s33]] 384
    %s35 = scalar_lea.smem [#allocation6], 2
    %36 = sst [smem:[%s35]] 24
    %38 = dma.general %s24, 768, %s2, %s25, 131072, [#allocation6], 0, 0
    %s39 = scalar_lea.hbm %s0, 2432
    %s40 = scalar_lea.sflag [#allocation2], 2
    %s42 = sshll.u32 1, 14
    %s43 = sxor.u32 4294967295, %s42
    %47 = sst [smem:[#allocation8]] 36352
    %s48 = scalar_lea.smem [#allocation8], 1
    %49 = sst [smem:[%s48]] 15360
    %s50 = scalar_lea.smem [#allocation8], 2
    %51 = sst [smem:[%s50]] 960
    %53 = dma.general %s39, 30720, %s3, %s40, 131072, [#allocation8], 0, 0
    %s54 = scalar_lea.hbm %s0, 17792
    %s55 = scalar_lea.sflag [#allocation2], 3
    %s57 = sshll.u32 1, 14
    %s58 = sxor.u32 4294967295, %s57
    %62 = sst [smem:[#allocation10]] 36352
    %s63 = scalar_lea.smem [#allocation10], 1
    %64 = sst [smem:[%s63]] 2048
    %s65 = scalar_lea.smem [#allocation10], 2
    %66 = sst [smem:[%s65]] 104
    %68 = dma.general %s54, 3328, %s4, %s55, 131072, [#allocation10], 0, 0
    %s69 = scalar_lea.hbm %s0, 30208
    %s70 = scalar_lea.hbm %s4, 1664
    %s71 = scalar_lea.sflag [#allocation2], 4
    %s73 = sshll.u32 1, 14
    %s74 = sxor.u32 4294967295, %s73
    %78 = sst [smem:[#allocation12]] 36352
    %s79 = scalar_lea.smem [#allocation12], 1
    %80 = sst [smem:[%s79]] 2048
    %s81 = scalar_lea.smem [#allocation12], 2
    %82 = sst [smem:[%s81]] 24
    %84 = dma.general %s69, 768, %s70, %s71, 131072, [#allocation12], 0, 0
    %s85 = scalar_lea.hbm %s0, 30592
    %s86 = scalar_lea.sflag [#allocation2], 5
    %s88 = sshll.u32 1, 14
    %s89 = sxor.u32 4294967295, %s88
    %93 = sst [smem:[#allocation14]] 36352
    %s94 = scalar_lea.smem [#allocation14], 1
    %95 = sst [smem:[%s94]] 5760
    %s96 = scalar_lea.smem [#allocation14], 2
    %97 = sst [smem:[%s96]] 360
    %99 = dma.general %s85, 11520, %s5, %s86, 131072, [#allocation14], 0, 0
    %s100 = smul.u32 2, 13
    %s101 = smul.u32 %s100, 8
    %s102 = smul.u32 %s101, 1
    %s103 = sshll.u32 %s102, 4
    %104 = dma.done [#allocation2], %s103
    %s105 = smul.u32 2, 3
    %s106 = smul.u32 %s105, 8
    %s107 = smul.u32 %s106, 1
    %s108 = sshll.u32 %s107, 4
    %109 = dma.done %s25, %s108
    %s110 = smul.u32 2, 120
    %s111 = smul.u32 %s110, 8
    %s112 = smul.u32 %s111, 1
    %s113 = sshll.u32 %s112, 4
    %114 = dma.done %s40, %s113
    %s115 = sshll.u32 %s102, 4
    %116 = dma.done %s55, %s115
    %s117 = sshll.u32 %s107, 4
    %118 = dma.done %s71, %s117
    %s119 = smul.u32 2, 45
    %s120 = smul.u32 %s119, 8
    %s121 = smul.u32 %s120, 1
    %s122 = sshll.u32 %s121, 4
    %123 = dma.done %s86, %s122
  %124 = vsyncmov [#allocation2]
  %s125 = vpop.sfrf %124
  %p126 = scmp.eq.s32.totalorder %s125, 0
  %p127 = pneg %p126
  %129 = shalt.err (%p127)
  %s130 = scalar_lea.sflag [#allocation2], 1
  %131 = vsyncmov %s130
  %s132 = vpop.sfrf %131
  %p133 = scmp.eq.s32.totalorder %s132, 0
  %p134 = pneg %p133
  %136 = shalt.err (%p134)
  %s137 = scalar_lea.sflag [#allocation2], 2
  %138 = vsyncmov %s137
  %s139 = vpop.sfrf %138
  %p140 = scmp.eq.s32.totalorder %s139, 0
  %p141 = pneg %p140
  %143 = shalt.err (%p141)
  %s144 = scalar_lea.sflag [#allocation2], 3
  %145 = vsyncmov %s144
  %s146 = vpop.sfrf %145
  %p147 = scmp.eq.s32.totalorder %s146, 0
  %p148 = pneg %p147
  %150 = shalt.err (%p148)
  %s151 = scalar_lea.sflag [#allocation2], 4
  %152 = vsyncmov %s151
  %s153 = vpop.sfrf %152
  %p154 = scmp.eq.s32.totalorder %s153, 0
  %p155 = pneg %p154
  %157 = shalt.err (%p155)
  %s158 = scalar_lea.sflag [#allocation2], 5
  %159 = vsyncmov %s158
  %s160 = vpop.sfrf %159
  %p161 = scmp.eq.s32.totalorder %s160, 0
  %p162 = pneg %p161
  %164 = shalt.err (%p162)

// kernel: tpu_custom_call.1
$region0: #{tpu_custom_call.1}
  #allocation0 [shape = 'u32[]', space=smem, size = 0x4, offset = 0x4, fixed_abs, tag = 'smem constant byte address 0x4 - core index']
  #allocation1 [shape = 'u32[144,128]{1,0:T(1,128)}', space=vmem, size = 0x12000, scoped, tag = 'internal scratch']
  %s0 = inlined_call_operand.hbm [shape: f32[2,284,8,128], index: 0, kind: input, shape index: {}]
  %s1 = inlined_call_operand.hbm [shape: f32[2,13,8,128], index: 1, kind: output, shape index: {0}]
  %s2 = inlined_call_operand.hbm [shape: f32[2,3,8,128], index: 2, kind: output, shape index: {1}]
  %s3 = inlined_call_operand.hbm [shape: f32[2,120,8,128], index: 3, kind: output, shape index: {2}]
  %s4 = inlined_call_operand.hbm [shape: f32[2,16,8,128], index: 4, kind: output, shape index: {3}]
  %s5 = inlined_call_operand.hbm [shape: f32[2,45,8,128], index: 5, kind: output, shape index: {4}]
  %6 = xla_tuple %s1, %s2, %s3, %s4, %s5
  %s7 = sld [smem:[#allocation0]]
  $region73: #{tpu_custom_call.1} parent=0
    _
  %s9 = ssub.s32 1, %s7
  %s10 = scalar_select 0, %s9, %s7
  $region1: #{tpu_custom_call.1} parent=0
    #allocation2 [shape = 'u8[2326528]{0}', space=vmem, size = 0x238000, scoped, tag = 'input window, operand 0']
    #allocation3 [shape = 's32[2]{0}', space=sflag, size = 0x8, scoped, tag = 'scoped memory for tpu_custom_call.1']
    #allocation4 [shape = 's32[2]{0}', space=sflag, size = 0x8, scoped, tag = 'scoped memory for tpu_custom_call.1']
    #allocation5 [shape = 'u8[106496]{0}', space=vmem, size = 0x1a000, scoped, tag = 'output window, operand 0']
    #allocation6 [shape = 'u8[24576]{0}', space=vmem, size = 0x6000, scoped, tag = 'output window, operand 1']
    #allocation7 [shape = 's32[2]{0}', space=sflag, size = 0x8, scoped, tag = 'scoped memory for tpu_custom_call.1']
    #allocation8 [shape = 'u8[983040]{0}', space=vmem, size = 0xf0000, scoped, tag = 'output window, operand 2']
    #allocation9 [shape = 'u8[131072]{0}', space=vmem, size = 0x20000, scoped, tag = 'output window, operand 3']
    #allocation10 [shape = 's32[2]{0}', space=sflag, size = 0x8, scoped, tag = 'scoped memory for tpu_custom_call.1']
    #allocation11 [shape = 'u8[368640]{0}', space=vmem, size = 0x5a000, scoped, tag = 'output window, operand 4']
    %11 = vsyncpa [#allocation3], 0
    %s12 = scalar_lea.sflag [#allocation3], 1
    %13 = vsyncpa %s12, 0
    %14 = vsyncpa [#allocation4], 0
    %s15 = scalar_lea.sflag [#allocation4], 1
    %16 = vsyncpa %s15, 0
    %17 = vsyncpa [#allocation7], 0
    %s18 = scalar_lea.sflag [#allocation7], 1
    %19 = vsyncpa %s18, 0
    %20 = vsyncpa [#allocation10], 0
    %s21 = scalar_lea.sflag [#allocation10], 1
    %22 = vsyncpa %s21, 0
    loop: start=0, step=1, limit=4
    $region2: #{tpu_custom_call.1} parent=1 // loop_pre_header
      _
    $region3: #{tpu_custom_call.1} parent=1 // loop_header
      %s24 = sphi 0, %s28
      %p25 = scmp.ge.s32.totalorder %s24, 4
      %s34 = sphi 0, %s36
      %s37 = sphi 0, %s34
      %s38 = sphi 0, %s37
      %s54 = sphi 0, %s38
      %s60 = sphi 0, %s62
      %s63 = sphi 0, %s60
      %s64 = sphi 0, %s63
      %s80 = sphi 0, %s64
      %s86 = sphi 0, %s88
      %s89 = sphi 0, %s86
      %s90 = sphi 0, %s89
      %s106 = sphi 0, %s90
      %s112 = sphi 0, %s114
      %s115 = sphi 0, %s112
      %s116 = sphi 0, %s115
      %s132 = sphi 0, %s116
      %s138 = sphi 0, %s140
      %s141 = sphi 0, %s138
      %s142 = sphi 0, %s141
      %s158 = sphi 0, %s142
      %s164 = sphi 0, %s166
      %s167 = sphi 0, %s164
      %s168 = sphi 0, %s167
      %s184 = sphi 0, %s168
    $region4: #{tpu_custom_call.1} parent=1 // loop_header_branch
      %27 = sbr.rel (%p25) target = $region8
    $region5: #{tpu_custom_call.1} parent=1 // loop_body
      %s29 = ssub.s32 %s24, 1
      %s30 = ssub.s32 %s24, 2
      %s31 = sadd.s32 %s24, 1
      %s32 = ssub.s32 %s24, %s31
      %p33 = scmp.eq.s32.totalorder %s32, 0
      %s35 = sadd.s32 %s34, 1
      %s36 = scalar_select %p33, %s34, %s35
      %p39 = pneg %p33
      %p40 = scmp.eq.s32.totalorder %s24, 1
      %p41 = por %p39, %p40
      %p42 = scmp.ne.s32.totalorder %s34, %s37
      %p43 = scmp.eq.s32.totalorder %s24, 0
      %p44 = por %p42, %p43
      %p45 = scmp.ne.s32.totalorder %s34, %s37
      %p46 = scmp.eq.s32.totalorder %s29, 1
      %p47 = por %p45, %p46
      %p48 = scmp.ne.s32.totalorder %s37, %s38
      %p49 = scmp.eq.s32.totalorder %s29, 0
      %p50 = por %p48, %p49
      %p51 = scmp.ne.s32.totalorder %s37, %s38
      %p52 = scmp.eq.s32.totalorder %s30, 1
      %p53 = por %p51, %p52
      %p55 = scmp.ne.s32.totalorder %s38, %s54
      %p56 = scmp.eq.s32.totalorder %s30, 0
      %p57 = por %p55, %p56
      %s58 = ssub.s32 %s24, %s31
      %p59 = scmp.eq.s32.totalorder %s58, 0
      %s61 = sadd.s32 %s60, 1
      %s62 = scalar_select %p59, %s60, %s61
      %p65 = pneg %p59
      %p66 = scmp.eq.s32.totalorder %s24, 1
      %p67 = por %p65, %p66
      %p68 = scmp.ne.s32.totalorder %s60, %s63
      %p69 = scmp.eq.s32.totalorder %s24, 0
      %p70 = por %p68, %p69
      %p71 = scmp.ne.s32.totalorder %s60, %s63
      %p72 = scmp.eq.s32.totalorder %s29, 1
      %p73 = por %p71, %p72
      %p74 = scmp.ne.s32.totalorder %s63, %s64
      %p75 = scmp.eq.s32.totalorder %s29, 0
      %p76 = por %p74, %p75
      %p77 = scmp.ne.s32.totalorder %s63, %s64
      %p78 = scmp.eq.s32.totalorder %s30, 1
      %p79 = por %p77, %p78
      %p81 = scmp.ne.s32.totalorder %s64, %s80
      %p82 = scmp.eq.s32.totalorder %s30, 0
      %p83 = por %p81, %p82
      %s84 = ssub.s32 %s24, %s31
      %p85 = scmp.eq.s32.totalorder %s84, 0
      %s87 = sadd.s32 %s86, 1
      %s88 = scalar_select %p85, %s86, %s87
      %p91 = pneg %p85
      %p92 = scmp.eq.s32.totalorder %s24, 1
      %p93 = por %p91, %p92
      %p94 = scmp.ne.s32.totalorder %s86, %s89
      %p95 = scmp.eq.s32.totalorder %s24, 0
      %p96 = por %p94, %p95
      %p97 = scmp.ne.s32.totalorder %s86, %s89
      %p98 = scmp.eq.s32.totalorder %s29, 1
      %p99 = por %p97, %p98
      %p100 = scmp.ne.s32.totalorder %s89, %s90
      %p101 = scmp.eq.s32.totalorder %s29, 0
      %p102 = por %p100, %p101
      %p103 = scmp.ne.s32.totalorder %s89, %s90
      %p104 = scmp.eq.s32.totalorder %s30, 1
      %p105 = por %p103, %p104
      %p107 = scmp.ne.s32.totalorder %s90, %s106
      %p108 = scmp.eq.s32.totalorder %s30, 0
      %p109 = por %p107, %p108
      %s110 = ssub.s32 %s24, %s31
      %p111 = scmp.eq.s32.totalorder %s110, 0
      %s113 = sadd.s32 %s112, 1
      %s114 = scalar_select %p111, %s112, %s113
      %p117 = pneg %p111
      %p118 = scmp.eq.s32.totalorder %s24, 1
      %p119 = por %p117, %p118
      %p120 = scmp.ne.s32.totalorder %s112, %s115
      %p121 = scmp.eq.s32.totalorder %s24, 0
      %p122 = por %p120, %p121
      %p123 = scmp.ne.s32.totalorder %s112, %s115
      %p124 = scmp.eq.s32.totalorder %s29, 1
      %p125 = por %p123, %p124
      %p126 = scmp.ne.s32.totalorder %s115, %s116
      %p127 = scmp.eq.s32.totalorder %s29, 0
      %p128 = por %p126, %p127
      %p129 = scmp.ne.s32.totalorder %s115, %s116
      %p130 = scmp.eq.s32.totalorder %s30, 1
      %p131 = por %p129, %p130
      %p133 = scmp.ne.s32.totalorder %s116, %s132
      %p134 = scmp.eq.s32.totalorder %s30, 0
      %p135 = por %p133, %p134
      %s136 = ssub.s32 %s24, %s31
      %p137 = scmp.eq.s32.totalorder %s136, 0
      %s139 = sadd.s32 %s138, 1
      %s140 = scalar_select %p137, %s138, %s139
      %p143 = pneg %p137
      %p144 = scmp.eq.s32.totalorder %s24, 1
      %p145 = por %p143, %p144
      %p146 = scmp.ne.s32.totalorder %s138, %s141
      %p147 = scmp.eq.s32.totalorder %s24, 0
      %p148 = por %p146, %p147
      %p149 = scmp.ne.s32.totalorder %s138, %s141
      %p150 = scmp.eq.s32.totalorder %s29, 1
      %p151 = por %p149, %p150
      %p152 = scmp.ne.s32.totalorder %s141, %s142
      %p153 = scmp.eq.s32.totalorder %s29, 0
      %p154 = por %p152, %p153
      %p155 = scmp.ne.s32.totalorder %s141, %s142
      %p156 = scmp.eq.s32.totalorder %s30, 1
      %p157 = por %p155, %p156
      %p159 = scmp.ne.s32.totalorder %s142, %s158
      %p160 = scmp.eq.s32.totalorder %s30, 0
      %p161 = por %p159, %p160
      %s162 = ssub.s32 %s24, %s31
      %p163 = scmp.eq.s32.totalorder %s162, 0
      %s165 = sadd.s32 %s164, 1
      %s166 = scalar_select %p163, %s164, %s165
      %p169 = pneg %p163
      %p170 = scmp.eq.s32.totalorder %s24, 1
      %p171 = por %p169, %p170
      %p172 = scmp.ne.s32.totalorder %s164, %s167
      %p173 = scmp.eq.s32.totalorder %s24, 0
      %p174 = por %p172, %p173
      %p175 = scmp.ne.s32.totalorder %s164, %s167
      %p176 = scmp.eq.s32.totalorder %s29, 1
      %p177 = por %p175, %p176
      %p178 = scmp.ne.s32.totalorder %s167, %s168
      %p179 = scmp.eq.s32.totalorder %s29, 0
      %p180 = por %p178, %p179
      %p181 = scmp.ne.s32.totalorder %s167, %s168
      %p182 = scmp.eq.s32.totalorder %s30, 1
      %p183 = por %p181, %p182
      %p185 = scmp.ne.s32.totalorder %s168, %s184
      %p186 = scmp.eq.s32.totalorder %s30, 0
      %p187 = por %p185, %p186
      %p188 = scmp.le.s32.totalorder 1, %s24
      %p189 = scmp.lt.s32.totalorder %s24, 3
      %p190 = pnand %p188, %p189
      %p191 = pneg %p190
      // Predicated region
      $region9: #{tpu_custom_call.1} parent=5 // pred_check
        _
      $region10: #{tpu_custom_call.1} parent=5 // pred_check_branch
        %193 = sbr.rel (%p190) target = $region12
      $region11: #{tpu_custom_call.1} parent=5 // pred_region
        %s194 = ssub.s32 %s24, 1
      $region12: #{tpu_custom_call.1} parent=5 // pred_fallthru
        _
      %p195 = scmp.lt.s32.totalorder %s24, 2
      // Predicated region
      $region13: #{tpu_custom_call.1} parent=5 // pred_check
        %p196 = pneg %p195
      $region14: #{tpu_custom_call.1} parent=5 // pred_check_branch
        %198 = sbr.rel (%p196) target = $region16
      $region15: #{tpu_custom_call.1} parent=5 // pred_region
        // Predicated region
        $region17: #{tpu_custom_call.1} parent=15 // pred_check
          %p199 = pneg %p44
        $region18: #{tpu_custom_call.1} parent=15 // pred_check_branch
          %201 = sbr.rel (%p199) target = $region20
        $region19: #{tpu_custom_call.1} parent=15 // pred_region
          %s202 = sand.u32 %s34, 1
          %s203 = scalar_lea.sflag [#allocation3], %s202
          %s204 = sand.u32 %s34, 1
          %s205 = smul.addr %s204, 2272
          %s206 = scalar_lea.vmem [#allocation2], %s205
          %s208 = ssub.s32 36352, 36352
          %209 = vsyncadd %s203, %s208
          %s210 = smul.addr %s24, 284
          %s211 = smul.addr %s210, 128
          %s212 = scalar_lea.hbm %s0, %s211
          %s213 = sshll.u32 %s206, 4
          %s214 = int_to_ptr.vmem [resolvable:$true] %s213
          %219 = dma.hbm_to_vmem [thread:$0]  %s212, 36352, %s214, %s203, 128, 128, 8
        $region20: #{tpu_custom_call.1} parent=15 // pred_fallthru
          _
      $region16: #{tpu_custom_call.1} parent=5 // pred_fallthru
        _
      %p220 = scmp.le.s32.totalorder 1, %s24
      %p221 = scmp.lt.s32.totalorder %s24, 3
      %p222 = pnand %p220, %p221
      %p223 = pneg %p222
      // Predicated region
      $region21: #{tpu_custom_call.1} parent=5 // pred_check
        _
      $region22: #{tpu_custom_call.1} parent=5 // pred_check_branch
        %225 = sbr.rel (%p222) target = $region24
      $region23: #{tpu_custom_call.1} parent=5 // pred_region
        %s226 = ssub.s32 %s24, 1
        %s227 = sand.u32 %s37, 1
        %s228 = scalar_lea.sflag [#allocation3], %s227
        %s229 = sand.u32 %s37, 1
        %s230 = smul.addr %s229, 2272
        %s231 = scalar_lea.vmem [#allocation2], %s230
        // Predicated region
        $region25: #{tpu_custom_call.1} parent=23 // pred_check
          %p232 = pneg %p50
        $region26: #{tpu_custom_call.1} parent=23 // pred_check_branch
          %234 = sbr.rel (%p232) target = $region28
        $region27: #{tpu_custom_call.1} parent=23 // pred_region
          %235 = dma.done %s228, 36352
        $region28: #{tpu_custom_call.1} parent=23 // pred_fallthru
          _
        %s236 = sand.u32 %s37, 1
        %s237 = scalar_lea.sflag [#allocation3], %s236
        %s238 = sand.u32 %s37, 1
        %s239 = smul.addr %s238, 2272
        %s240 = scalar_lea.vmem [#allocation2], %s239
        %p241 = pneg %p50
        %p242 = pneg %p47
        %p243 = pneg %p76
        %p244 = pneg %p73
        %s245 = sand.u32 %s63, 1
        %s246 = scalar_lea.sflag [#allocation4], %s245
        %s247 = sand.u32 %s63, 1
        %s248 = smul.addr %s247, 104
        %s249 = scalar_lea.vmem [#allocation5], %s248
        %p250 = pneg %p102
        %p251 = pneg %p99
        %s252 = sand.u32 %s29, 1
        %s253 = scalar_lea.sflag [#allocation7], %s252
        %s254 = sand.u32 %s89, 1
        %s255 = smul.addr %s254, 24
        %s256 = scalar_lea.vmem [#allocation6], %s255
        %p257 = pneg %p128
        %p258 = pneg %p125
        %s259 = sand.u32 %s29, 1
        %s260 = scalar_lea.sflag [#allocation7], %s259
        %s261 = sand.u32 %s115, 1
        %s262 = smul.addr %s261, 960
        %s263 = scalar_lea.vmem [#allocation8], %s262
        %p264 = pneg %p154
        %p265 = pneg %p151
        %s266 = sand.u32 %s29, 1
        %s267 = scalar_lea.sflag [#allocation10], %s266
        %s268 = sand.u32 %s141, 1
        %s269 = smul.addr %s268, 128
        %s270 = scalar_lea.vmem [#allocation9], %s269
        %p271 = pneg %p180
        %p272 = pneg %p177
        %s273 = sand.u32 %s29, 1
        %s274 = scalar_lea.sflag [#allocation10], %s273
        %s275 = sand.u32 %s167, 1
        %s276 = smul.addr %s275, 360
        %s277 = scalar_lea.vmem [#allocation11], %s276
        %v278 = vld [vmem:[%s231] sm:$0xff]
        %v279 = vld [vmem:[%s231 + $0x8] sm:$0xff]
        %v280 = vld [vmem:[%s231 + $0x10] sm:$0xff]
        %v281 = vld [vmem:[%s231 + $0x18] sm:$0xff]
        %v282 = vld [vmem:[%s231 + $0x20] sm:$0xff]
        %v283 = vld [vmem:[%s231 + $0x28] sm:$0xff]
        %v284 = vld [vmem:[%s231 + $0x30] sm:$0xff]
        %v285 = vld [vmem:[%s231 + $0x38] sm:$0xff]
        %v286 = vld [vmem:[%s231 + $0x40] sm:$0xff]
        %v287 = vld [vmem:[%s231 + $0x48] sm:$0xff]
        %v288 = vld [vmem:[%s231 + $0x50] sm:$0xff]
        %v289 = vld [vmem:[%s231 + $0x58] sm:$0xff]
        %v290 = vld [vmem:[%s231 + $0x60] sm:$0xff]
        %291 = vst [vmem:[%s249] sm:$0xff] %v278
        %292 = vst [vmem:[%s249 + $0x8] sm:$0xff] %v279
        %293 = vst [vmem:[%s249 + $0x10] sm:$0xff] %v280
        %294 = vst [vmem:[%s249 + $0x18] sm:$0xff] %v281
        %295 = vst [vmem:[%s249 + $0x20] sm:$0xff] %v282
        %296 = vst [vmem:[%s249 + $0x28] sm:$0xff] %v283
        %297 = vst [vmem:[%s249 + $0x30] sm:$0xff] %v284
        %298 = vst [vmem:[%s249 + $0x38] sm:$0xff] %v285
        %299 = vst [vmem:[%s249 + $0x40] sm:$0xff] %v286
        %300 = vst [vmem:[%s249 + $0x48] sm:$0xff] %v287
        %301 = vst [vmem:[%s249 + $0x50] sm:$0xff] %v288
        %302 = vst [vmem:[%s249 + $0x58] sm:$0xff] %v289
        %303 = vst [vmem:[%s249 + $0x60] sm:$0xff] %v290
        %s304 = scalar_lea.vmem %s231, 128 [#allocation2]
        %v305 = vld [vmem:[%s304] sm:$0xff]
        %v306 = vld [vmem:[%s304 + $0x8] sm:$0xff]
        %v307 = vld [vmem:[%s304 + $0x10] sm:$0xff]
        %308 = vst [vmem:[%s256] sm:$0xff] %v305
        %309 = vst [vmem:[%s256 + $0x8] sm:$0xff] %v306
        %310 = vst [vmem:[%s256 + $0x10] sm:$0xff] %v307
        %s311 = scalar_lea.vmem %s231, 152 [#allocation2]
        %v312 = vld [vmem:[%s311] sm:$0xff]
        %v313 = vld [vmem:[%s311 + $0x8] sm:$0xff]
        %v314 = vld [vmem:[%s311 + $0x10] sm:$0xff]
        %v315 = vld [vmem:[%s311 + $0x18] sm:$0xff]
        %v316 = vld [vmem:[%s311 + $0x20] sm:$0xff]
        %v317 = vld [vmem:[%s311 + $0x28] sm:$0xff]
        %v318 = vld [vmem:[%s311 + $0x30] sm:$0xff]
        %v319 = vld [vmem:[%s311 + $0x38] sm:$0xff]
        %v320 = vld [vmem:[%s311 + $0x40] sm:$0xff]
        %v321 = vld [vmem:[%s311 + $0x48] sm:$0xff]
        %v322 = vld [vmem:[%s311 + $0x50] sm:$0xff]
        %v323 = vld [vmem:[%s311 + $0x58] sm:$0xff]
        %v324 = vld [vmem:[%s311 + $0x60] sm:$0xff]
        %v325 = vld [vmem:[%s311 + $0x68] sm:$0xff]
        %v326 = vld [vmem:[%s311 + $0x70] sm:$0xff]
        %v327 = vld [vmem:[%s311 + $0x78] sm:$0xff]
        %v328 = vld [vmem:[%s311 + $0x80] sm:$0xff]
        %v329 = vld [vmem:[%s311 + $0x88] sm:$0xff]
        %v330 = vld [vmem:[%s311 + $0x90] sm:$0xff]
        %v331 = vld [vmem:[%s311 + $0x98] sm:$0xff]
        %v332 = vld [vmem:[%s311 + $0xa0] sm:$0xff]
        %v333 = vld [vmem:[%s311 + $0xa8] sm:$0xff]
        %v334 = vld [vmem:[%s311 + $0xb0] sm:$0xff]
        %v335 = vld [vmem:[%s311 + $0xb8] sm:$0xff]
        %v336 = vld [vmem:[%s311 + $0xc0] sm:$0xff]
        %v337 = vld [vmem:[%s311 + $0xc8] sm:$0xff]
        %v338 = vld [vmem:[%s311 + $0xd0] sm:$0xff]
        %v339 = vld [vmem:[%s311 + $0xd8] sm:$0xff]
        %v340 = vld [vmem:[%s311 + $0xe0] sm:$0xff]
        %v341 = vld [vmem:[%s311 + $0xe8] sm:$0xff]
        %v342 = vld [vmem:[%s311 + $0xf0] sm:$0xff]
        %v343 = vld [vmem:[%s311 + $0xf8] sm:$0xff]
        %v344 = vld [vmem:[%s311 + $0x100] sm:$0xff]
        %v345 = vld [vmem:[%s311 + $0x108] sm:$0xff]
        %v346 = vld [vmem:[%s311 + $0x110] sm:$0xff]
        %v347 = vld [vmem:[%s311 + $0x118] sm:$0xff]
        %v348 = vld [vmem:[%s311 + $0x120] sm:$0xff]
        %v349 = vld [vmem:[%s311 + $0x128] sm:$0xff]
        %v350 = vld [vmem:[%s311 + $0x130] sm:$0xff]
        %v351 = vld [vmem:[%s311 + $0x138] sm:$0xff]
        %v352 = vld [vmem:[%s311 + $0x140] sm:$0xff]
        %v353 = vld [vmem:[%s311 + $0x148] sm:$0xff]
        %v354 = vld [vmem:[%s311 + $0x150] sm:$0xff]
        %v355 = vld [vmem:[%s311 + $0x158] sm:$0xff]
        %v356 = vld [vmem:[%s311 + $0x160] sm:$0xff]
        %v357 = vld [vmem:[%s311 + $0x168] sm:$0xff]
        %v358 = vld [vmem:[%s311 + $0x170] sm:$0xff]
        %v359 = vld [vmem:[%s311 + $0x178] sm:$0xff]
        %v360 = vld [vmem:[%s311 + $0x180] sm:$0xff]
        %v361 = vld [vmem:[%s311 + $0x188] sm:$0xff]
        %v362 = vld [vmem:[%s311 + $0x190] sm:$0xff]
        %v363 = vld [vmem:[%s311 + $0x198] sm:$0xff]
        %v364 = vld [vmem:[%s311 + $0x1a0] sm:$0xff]
        %v365 = vld [vmem:[%s311 + $0x1a8] sm:$0xff]
        %v366 = vld [vmem:[%s311 + $0x1b0] sm:$0xff]
        %v367 = vld [vmem:[%s311 + $0x1b8] sm:$0xff]
        %v368 = vld [vmem:[%s311 + $0x1c0] sm:$0xff]
        %v369 = vld [vmem:[%s311 + $0x1c8] sm:$0xff]
        %v370 = vld [vmem:[%s311 + $0x1d0] sm:$0xff]
        %v371 = vld [vmem:[%s311 + $0x1d8] sm:$0xff]
        %v372 = vld [vmem:[%s311 + $0x1e0] sm:$0xff]
        %v373 = vld [vmem:[%s311 + $0x1e8] sm:$0xff]
        %v374 = vld [vmem:[%s311 + $0x1f0] sm:$0xff]
        %v375 = vld [vmem:[%s311 + $0x1f8] sm:$0xff]
        %v376 = vld [vmem:[%s311 + $0x200] sm:$0xff]
        %v377 = vld [vmem:[%s311 + $0x208] sm:$0xff]
        %v378 = vld [vmem:[%s311 + $0x210] sm:$0xff]
        %v379 = vld [vmem:[%s311 + $0x218] sm:$0xff]
        %v380 = vld [vmem:[%s311 + $0x220] sm:$0xff]
        %v381 = vld [vmem:[%s311 + $0x228] sm:$0xff]
        %v382 = vld [vmem:[%s311 + $0x230] sm:$0xff]
        %v383 = vld [vmem:[%s311 + $0x238] sm:$0xff]
        %v384 = vld [vmem:[%s311 + $0x240] sm:$0xff]
        %v385 = vld [vmem:[%s311 + $0x248] sm:$0xff]
        %v386 = vld [vmem:[%s311 + $0x250] sm:$0xff]
        %v387 = vld [vmem:[%s311 + $0x258] sm:$0xff]
        %v388 = vld [vmem:[%s311 + $0x260] sm:$0xff]
        %v389 = vld [vmem:[%s311 + $0x268] sm:$0xff]
        %v390 = vld [vmem:[%s311 + $0x270] sm:$0xff]
        %v391 = vld [vmem:[%s311 + $0x278] sm:$0xff]
        %v392 = vld [vmem:[%s311 + $0x280] sm:$0xff]
        %v393 = vld [vmem:[%s311 + $0x288] sm:$0xff]
        %v394 = vld [vmem:[%s311 + $0x290] sm:$0xff]
        %v395 = vld [vmem:[%s311 + $0x298] sm:$0xff]
        %v396 = vld [vmem:[%s311 + $0x2a0] sm:$0xff]
        %v397 = vld [vmem:[%s311 + $0x2a8] sm:$0xff]
        %v398 = vld [vmem:[%s311 + $0x2b0] sm:$0xff]
        %v399 = vld [vmem:[%s311 + $0x2b8] sm:$0xff]
        %v400 = vld [vmem:[%s311 + $0x2c0] sm:$0xff]
        %v401 = vld [vmem:[%s311 + $0x2c8] sm:$0xff]
        %v402 = vld [vmem:[%s311 + $0x2d0] sm:$0xff]
        %v403 = vld [vmem:[%s311 + $0x2d8] sm:$0xff]
        %v404 = vld [vmem:[%s311 + $0x2e0] sm:$0xff]
        %v405 = vld [vmem:[%s311 + $0x2e8] sm:$0xff]
        %v406 = vld [vmem:[%s311 + $0x2f0] sm:$0xff]
        %v407 = vld [vmem:[%s311 + $0x2f8] sm:$0xff]
        %v408 = vld [vmem:[%s311 + $0x300] sm:$0xff]
        %v409 = vld [vmem:[%s311 + $0x308] sm:$0xff]
        %v410 = vld [vmem:[%s311 + $0x310] sm:$0xff]
        %v411 = vld [vmem:[%s311 + $0x318] sm:$0xff]
        %v412 = vld [vmem:[%s311 + $0x320] sm:$0xff]
        %v413 = vld [vmem:[%s311 + $0x328] sm:$0xff]
        %v414 = vld [vmem:[%s311 + $0x330] sm:$0xff]
        %v415 = vld [vmem:[%s311 + $0x338] sm:$0xff]
        %v416 = vld [vmem:[%s311 + $0x340] sm:$0xff]
        %v417 = vld [vmem:[%s311 + $0x348] sm:$0xff]
        %v418 = vld [vmem:[%s311 + $0x350] sm:$0xff]
        %v419 = vld [vmem:[%s311 + $0x358] sm:$0xff]
        %v420 = vld [vmem:[%s311 + $0x360] sm:$0xff]
        %v421 = vld [vmem:[%s311 + $0x368] sm:$0xff]
        %v422 = vld [vmem:[%s311 + $0x370] sm:$0xff]
        %v423 = vld [vmem:[%s311 + $0x378] sm:$0xff]
        %v424 = vld [vmem:[%s311 + $0x380] sm:$0xff]
        %v425 = vld [vmem:[%s311 + $0x388] sm:$0xff]
        %v426 = vld [vmem:[%s311 + $0x390] sm:$0xff]
        %v427 = vld [vmem:[%s311 + $0x398] sm:$0xff]
        %v428 = vld [vmem:[%s311 + $0x3a0] sm:$0xff]
        %v429 = vld [vmem:[%s311 + $0x3a8] sm:$0xff]
        %v430 = vld [vmem:[%s311 + $0x3b0] sm:$0xff]
        %v431 = vld [vmem:[%s311 + $0x3b8] sm:$0xff]
        %432 = vst [vmem:[%s263] sm:$0xff] %v312
        %433 = vst [vmem:[%s263 + $0x8] sm:$0xff] %v313
        %434 = vst [vmem:[%s263 + $0x10] sm:$0xff] %v314
        %435 = vst [vmem:[%s263 + $0x18] sm:$0xff] %v315
        %436 = vst [vmem:[%s263 + $0x20] sm:$0xff] %v316
        %437 = vst [vmem:[%s263 + $0x28] sm:$0xff] %v317
        %438 = vst [vmem:[%s263 + $0x30] sm:$0xff] %v318
        %439 = vst [vmem:[%s263 + $0x38] sm:$0xff] %v319
        %440 = vst [vmem:[%s263 + $0x40] sm:$0xff] %v320
        %441 = vst [vmem:[%s263 + $0x48] sm:$0xff] %v321
        %442 = vst [vmem:[%s263 + $0x50] sm:$0xff] %v322
        %443 = vst [vmem:[%s263 + $0x58] sm:$0xff] %v323
        %444 = vst [vmem:[%s263 + $0x60] sm:$0xff] %v324
        %445 = vst [vmem:[%s263 + $0x68] sm:$0xff] %v325
        %446 = vst [vmem:[%s263 + $0x70] sm:$0xff] %v326
        %447 = vst [vmem:[%s263 + $0x78] sm:$0xff] %v327
        %448 = vst [vmem:[%s263 + $0x80] sm:$0xff] %v328
        %449 = vst [vmem:[%s263 + $0x88] sm:$0xff] %v329
        %450 = vst [vmem:[%s263 + $0x90] sm:$0xff] %v330
        %451 = vst [vmem:[%s263 + $0x98] sm:$0xff] %v331
        %452 = vst [vmem:[%s263 + $0xa0] sm:$0xff] %v332
        %453 = vst [vmem:[%s263 + $0xa8] sm:$0xff] %v333
        %454 = vst [vmem:[%s263 + $0xb0] sm:$0xff] %v334
        %455 = vst [vmem:[%s263 + $0xb8] sm:$0xff] %v335
        %456 = vst [vmem:[%s263 + $0xc0] sm:$0xff] %v336
        %457 = vst [vmem:[%s263 + $0xc8] sm:$0xff] %v337
        %458 = vst [vmem:[%s263 + $0xd0] sm:$0xff] %v338
        %459 = vst [vmem:[%s263 + $0xd8] sm:$0xff] %v339
        %460 = vst [vmem:[%s263 + $0xe0] sm:$0xff] %v340
        %461 = vst [vmem:[%s263 + $0xe8] sm:$0xff] %v341
        %462 = vst [vmem:[%s263 + $0xf0] sm:$0xff] %v342
        %463 = vst [vmem:[%s263 + $0xf8] sm:$0xff] %v343
        %464 = vst [vmem:[%s263 + $0x100] sm:$0xff] %v344
        %465 = vst [vmem:[%s263 + $0x108] sm:$0xff] %v345
        %466 = vst [vmem:[%s263 + $0x110] sm:$0xff] %v346
        %467 = vst [vmem:[%s263 + $0x118] sm:$0xff] %v347
        %468 = vst [vmem:[%s263 + $0x120] sm:$0xff] %v348
        %469 = vst [vmem:[%s263 + $0x128] sm:$0xff] %v349
        %470 = vst [vmem:[%s263 + $0x130] sm:$0xff] %v350
        %471 = vst [vmem:[%s263 + $0x138] sm:$0xff] %v351
        %472 = vst [vmem:[%s263 + $0x140] sm:$0xff] %v352
        %473 = vst [vmem:[%s263 + $0x148] sm:$0xff] %v353
        %474 = vst [vmem:[%s263 + $0x150] sm:$0xff] %v354
        %475 = vst [vmem:[%s263 + $0x158] sm:$0xff] %v355
        %476 = vst [vmem:[%s263 + $0x160] sm:$0xff] %v356
        %477 = vst [vmem:[%s263 + $0x168] sm:$0xff] %v357
        %478 = vst [vmem:[%s263 + $0x170] sm:$0xff] %v358
        %479 = vst [vmem:[%s263 + $0x178] sm:$0xff] %v359
        %480 = vst [vmem:[%s263 + $0x180] sm:$0xff] %v360
        %481 = vst [vmem:[%s263 + $0x188] sm:$0xff] %v361
        %482 = vst [vmem:[%s263 + $0x190] sm:$0xff] %v362
        %483 = vst [vmem:[%s263 + $0x198] sm:$0xff] %v363
        %484 = vst [vmem:[%s263 + $0x1a0] sm:$0xff] %v364
        %485 = vst [vmem:[%s263 + $0x1a8] sm:$0xff] %v365
        %486 = vst [vmem:[%s263 + $0x1b0] sm:$0xff] %v366
        %487 = vst [vmem:[%s263 + $0x1b8] sm:$0xff] %v367
        %488 = vst [vmem:[%s263 + $0x1c0] sm:$0xff] %v368
        %489 = vst [vmem:[%s263 + $0x1c8] sm:$0xff] %v369
        %490 = vst [vmem:[%s263 + $0x1d0] sm:$0xff] %v370
        %491 = vst [vmem:[%s263 + $0x1d8] sm:$0xff] %v371
        %492 = vst [vmem:[%s263 + $0x1e0] sm:$0xff] %v372
        %493 = vst [vmem:[%s263 + $0x1e8] sm:$0xff] %v373
        %494 = vst [vmem:[%s263 + $0x1f0] sm:$0xff] %v374
        %495 = vst [vmem:[%s263 + $0x1f8] sm:$0xff] %v375
        %496 = vst [vmem:[%s263 + $0x200] sm:$0xff] %v376
        %497 = vst [vmem:[%s263 + $0x208] sm:$0xff] %v377
        %498 = vst [vmem:[%s263 + $0x210] sm:$0xff] %v378
        %499 = vst [vmem:[%s263 + $0x218] sm:$0xff] %v379
        %500 = vst [vmem:[%s263 + $0x220] sm:$0xff] %v380
        %501 = vst [vmem:[%s263 + $0x228] sm:$0xff] %v381
        %502 = vst [vmem:[%s263 + $0x230] sm:$0xff] %v382
        %503 = vst [vmem:[%s263 + $0x238] sm:$0xff] %v383
        %504 = vst [vmem:[%s263 + $0x240] sm:$0xff] %v384
        %505 = vst [vmem:[%s263 + $0x248] sm:$0xff] %v385
        %506 = vst [vmem:[%s263 + $0x250] sm:$0xff] %v386
        %507 = vst [vmem:[%s263 + $0x258] sm:$0xff] %v387
        %508 = vst [vmem:[%s263 + $0x260] sm:$0xff] %v388
        %509 = vst [vmem:[%s263 + $0x268] sm:$0xff] %v389
        %510 = vst [vmem:[%s263 + $0x270] sm:$0xff] %v390
        %511 = vst [vmem:[%s263 + $0x278] sm:$0xff] %v391
        %512 = vst [vmem:[%s263 + $0x280] sm:$0xff] %v392
        %513 = vst [vmem:[%s263 + $0x288] sm:$0xff] %v393
        %514 = vst [vmem:[%s263 + $0x290] sm:$0xff] %v394
        %515 = vst [vmem:[%s263 + $0x298] sm:$0xff] %v395
        %516 = vst [vmem:[%s263 + $0x2a0] sm:$0xff] %v396
        %517 = vst [vmem:[%s263 + $0x2a8] sm:$0xff] %v397
        %518 = vst [vmem:[%s263 + $0x2b0] sm:$0xff] %v398
        %519 = vst [vmem:[%s263 + $0x2b8] sm:$0xff] %v399
        %520 = vst [vmem:[%s263 + $0x2c0] sm:$0xff] %v400
        %521 = vst [vmem:[%s263 + $0x2c8] sm:$0xff] %v401
        %522 = vst [vmem:[%s263 + $0x2d0] sm:$0xff] %v402
        %523 = vst [vmem:[%s263 + $0x2d8] sm:$0xff] %v403
        %524 = vst [vmem:[%s263 + $0x2e0] sm:$0xff] %v404
        %525 = vst [vmem:[%s263 + $0x2e8] sm:$0xff] %v405
        %526 = vst [vmem:[%s263 + $0x2f0] sm:$0xff] %v406
        %527 = vst [vmem:[%s263 + $0x2f8] sm:$0xff] %v407
        %528 = vst [vmem:[%s263 + $0x300] sm:$0xff] %v408
        %529 = vst [vmem:[%s263 + $0x308] sm:$0xff] %v409
        %530 = vst [vmem:[%s263 + $0x310] sm:$0xff] %v410
        %531 = vst [vmem:[%s263 + $0x318] sm:$0xff] %v411
        %532 = vst [vmem:[%s263 + $0x320] sm:$0xff] %v412
        %533 = vst [vmem:[%s263 + $0x328] sm:$0xff] %v413
        %534 = vst [vmem:[%s263 + $0x330] sm:$0xff] %v414
        %535 = vst [vmem:[%s263 + $0x338] sm:$0xff] %v415
        %536 = vst [vmem:[%s263 + $0x340] sm:$0xff] %v416
        %537 = vst [vmem:[%s263 + $0x348] sm:$0xff] %v417
        %538 = vst [vmem:[%s263 + $0x350] sm:$0xff] %v418
        %539 = vst [vmem:[%s263 + $0x358] sm:$0xff] %v419
        %540 = vst [vmem:[%s263 + $0x360] sm:$0xff] %v420
        %541 = vst [vmem:[%s263 + $0x368] sm:$0xff] %v421
        %542 = vst [vmem:[%s263 + $0x370] sm:$0xff] %v422
        %543 = vst [vmem:[%s263 + $0x378] sm:$0xff] %v423
        %544 = vst [vmem:[%s263 + $0x380] sm:$0xff] %v424
        %545 = vst [vmem:[%s263 + $0x388] sm:$0xff] %v425
        %546 = vst [vmem:[%s263 + $0x390] sm:$0xff] %v426
        %547 = vst [vmem:[%s263 + $0x398] sm:$0xff] %v427
        %548 = vst [vmem:[%s263 + $0x3a0] sm:$0xff] %v428
        %549 = vst [vmem:[%s263 + $0x3a8] sm:$0xff] %v429
        %550 = vst [vmem:[%s263 + $0x3b0] sm:$0xff] %v430
        %551 = vst [vmem:[%s263 + $0x3b8] sm:$0xff] %v431
        %s552 = scalar_lea.vmem %s231, 1112 [#allocation2]
        %v553 = vld [vmem:[%s552] sm:$0xff]
        %v554 = vld [vmem:[%s552 + $0x8] sm:$0xff]
        %v555 = vld [vmem:[%s552 + $0x10] sm:$0xff]
        %v556 = vld [vmem:[%s552 + $0x18] sm:$0xff]
        %v557 = vld [vmem:[%s552 + $0x20] sm:$0xff]
        %v558 = vld [vmem:[%s552 + $0x28] sm:$0xff]
        %v559 = vld [vmem:[%s552 + $0x30] sm:$0xff]
        %v560 = vld [vmem:[%s552 + $0x38] sm:$0xff]
        %v561 = vld [vmem:[%s552 + $0x40] sm:$0xff]
        %v562 = vld [vmem:[%s552 + $0x48] sm:$0xff]
        %v563 = vld [vmem:[%s552 + $0x50] sm:$0xff]
        %v564 = vld [vmem:[%s552 + $0x58] sm:$0xff]
        %v565 = vld [vmem:[%s552 + $0x60] sm:$0xff]
        %566 = vst [vmem:[%s270] sm:$0xff] %v553
        %567 = vst [vmem:[%s270 + $0x8] sm:$0xff] %v554
        %568 = vst [vmem:[%s270 + $0x10] sm:$0xff] %v555
        %569 = vst [vmem:[%s270 + $0x18] sm:$0xff] %v556
        %570 = vst [vmem:[%s270 + $0x20] sm:$0xff] %v557
        %571 = vst [vmem:[%s270 + $0x28] sm:$0xff] %v558
        %572 = vst [vmem:[%s270 + $0x30] sm:$0xff] %v559
        %573 = vst [vmem:[%s270 + $0x38] sm:$0xff] %v560
        %574 = vst [vmem:[%s270 + $0x40] sm:$0xff] %v561
        %575 = vst [vmem:[%s270 + $0x48] sm:$0xff] %v562
        %576 = vst [vmem:[%s270 + $0x50] sm:$0xff] %v563
        %577 = vst [vmem:[%s270 + $0x58] sm:$0xff] %v564
        %578 = vst [vmem:[%s270 + $0x60] sm:$0xff] %v565
        %s579 = scalar_lea.vmem %s231, 1888 [#allocation2]
        %v580 = vld [vmem:[%s579] sm:$0xff]
        %v581 = vld [vmem:[%s579 + $0x8] sm:$0xff]
        %v582 = vld [vmem:[%s579 + $0x10] sm:$0xff]
        %s583 = scalar_lea.vmem %s270, 104 [#allocation9]
        %584 = vst [vmem:[%s583] sm:$0xff] %v580
        %585 = vst [vmem:[%s583 + $0x8] sm:$0xff] %v581
        %586 = vst [vmem:[%s583 + $0x10] sm:$0xff] %v582
        %s587 = scalar_lea.vmem %s231, 1912 [#allocation2]
        %v588 = vld [vmem:[%s587] sm:$0xff]
        %v589 = vld [vmem:[%s587 + $0x8] sm:$0xff]
        %v590 = vld [vmem:[%s587 + $0x10] sm:$0xff]
        %v591 = vld [vmem:[%s587 + $0x18] sm:$0xff]
        %v592 = vld [vmem:[%s587 + $0x20] sm:$0xff]
        %v593 = vld [vmem:[%s587 + $0x28] sm:$0xff]
        %v594 = vld [vmem:[%s587 + $0x30] sm:$0xff]
        %v595 = vld [vmem:[%s587 + $0x38] sm:$0xff]
        %v596 = vld [vmem:[%s587 + $0x40] sm:$0xff]
        %v597 = vld [vmem:[%s587 + $0x48] sm:$0xff]
        %v598 = vld [vmem:[%s587 + $0x50] sm:$0xff]
        %v599 = vld [vmem:[%s587 + $0x58] sm:$0xff]
        %v600 = vld [vmem:[%s587 + $0x60] sm:$0xff]
        %v601 = vld [vmem:[%s587 + $0x68] sm:$0xff]
        %v602 = vld [vmem:[%s587 + $0x70] sm:$0xff]
        %v603 = vld [vmem:[%s587 + $0x78] sm:$0xff]
        %v604 = vld [vmem:[%s587 + $0x80] sm:$0xff]
        %v605 = vld [vmem:[%s587 + $0x88] sm:$0xff]
        %v606 = vld [vmem:[%s587 + $0x90] sm:$0xff]
        %v607 = vld [vmem:[%s587 + $0x98] sm:$0xff]
        %v608 = vld [vmem:[%s587 + $0xa0] sm:$0xff]
        %v609 = vld [vmem:[%s587 + $0xa8] sm:$0xff]
        %v610 = vld [vmem:[%s587 + $0xb0] sm:$0xff]
        %v611 = vld [vmem:[%s587 + $0xb8] sm:$0xff]
        %v612 = vld [vmem:[%s587 + $0xc0] sm:$0xff]
        %v613 = vld [vmem:[%s587 + $0xc8] sm:$0xff]
        %v614 = vld [vmem:[%s587 + $0xd0] sm:$0xff]
        %v615 = vld [vmem:[%s587 + $0xd8] sm:$0xff]
        %v616 = vld [vmem:[%s587 + $0xe0] sm:$0xff]
        %v617 = vld [vmem:[%s587 + $0xe8] sm:$0xff]
        %v618 = vld [vmem:[%s587 + $0xf0] sm:$0xff]
        %v619 = vld [vmem:[%s587 + $0xf8] sm:$0xff]
        %v620 = vld [vmem:[%s587 + $0x100] sm:$0xff]
        %v621 = vld [vmem:[%s587 + $0x108] sm:$0xff]
        %v622 = vld [vmem:[%s587 + $0x110] sm:$0xff]
        %v623 = vld [vmem:[%s587 + $0x118] sm:$0xff]
        %v624 = vld [vmem:[%s587 + $0x120] sm:$0xff]
        %v625 = vld [vmem:[%s587 + $0x128] sm:$0xff]
        %v626 = vld [vmem:[%s587 + $0x130] sm:$0xff]
        %v627 = vld [vmem:[%s587 + $0x138] sm:$0xff]
        %v628 = vld [vmem:[%s587 + $0x140] sm:$0xff]
        %v629 = vld [vmem:[%s587 + $0x148] sm:$0xff]
        %v630 = vld [vmem:[%s587 + $0x150] sm:$0xff]
        %v631 = vld [vmem:[%s587 + $0x158] sm:$0xff]
        %v632 = vld [vmem:[%s587 + $0x160] sm:$0xff]
        %633 = vst [vmem:[%s277] sm:$0xff] %v588
        %634 = vst [vmem:[%s277 + $0x8] sm:$0xff] %v589
        %635 = vst [vmem:[%s277 + $0x10] sm:$0xff] %v590
        %636 = vst [vmem:[%s277 + $0x18] sm:$0xff] %v591
        %637 = vst [vmem:[%s277 + $0x20] sm:$0xff] %v592
        %638 = vst [vmem:[%s277 + $0x28] sm:$0xff] %v593
        %639 = vst [vmem:[%s277 + $0x30] sm:$0xff] %v594
        %640 = vst [vmem:[%s277 + $0x38] sm:$0xff] %v595
        %641 = vst [vmem:[%s277 + $0x40] sm:$0xff] %v596
        %642 = vst [vmem:[%s277 + $0x48] sm:$0xff] %v597
        %643 = vst [vmem:[%s277 + $0x50] sm:$0xff] %v598
        %644 = vst [vmem:[%s277 + $0x58] sm:$0xff] %v599
        %645 = vst [vmem:[%s277 + $0x60] sm:$0xff] %v600
        %646 = vst [vmem:[%s277 + $0x68] sm:$0xff] %v601
        %647 = vst [vmem:[%s277 + $0x70] sm:$0xff] %v602
        %648 = vst [vmem:[%s277 + $0x78] sm:$0xff] %v603
        %649 = vst [vmem:[%s277 + $0x80] sm:$0xff] %v604
        %650 = vst [vmem:[%s277 + $0x88] sm:$0xff] %v605
        %651 = vst [vmem:[%s277 + $0x90] sm:$0xff] %v606
        %652 = vst [vmem:[%s277 + $0x98] sm:$0xff] %v607
        %653 = vst [vmem:[%s277 + $0xa0] sm:$0xff] %v608
        %654 = vst [vmem:[%s277 + $0xa8] sm:$0xff] %v609
        %655 = vst [vmem:[%s277 + $0xb0] sm:$0xff] %v610
        %656 = vst [vmem:[%s277 + $0xb8] sm:$0xff] %v611
        %657 = vst [vmem:[%s277 + $0xc0] sm:$0xff] %v612
        %658 = vst [vmem:[%s277 + $0xc8] sm:$0xff] %v613
        %659 = vst [vmem:[%s277 + $0xd0] sm:$0xff] %v614
        %660 = vst [vmem:[%s277 + $0xd8] sm:$0xff] %v615
        %661 = vst [vmem:[%s277 + $0xe0] sm:$0xff] %v616
        %662 = vst [vmem:[%s277 + $0xe8] sm:$0xff] %v617
        %663 = vst [vmem:[%s277 + $0xf0] sm:$0xff] %v618
        %664 = vst [vmem:[%s277 + $0xf8] sm:$0xff] %v619
        %665 = vst [vmem:[%s277 + $0x100] sm:$0xff] %v620
        %666 = vst [vmem:[%s277 + $0x108] sm:$0xff] %v621
        %667 = vst [vmem:[%s277 + $0x110] sm:$0xff] %v622
        %668 = vst [vmem:[%s277 + $0x118] sm:$0xff] %v623
        %669 = vst [vmem:[%s277 + $0x120] sm:$0xff] %v624
        %670 = vst [vmem:[%s277 + $0x128] sm:$0xff] %v625
        %671 = vst [vmem:[%s277 + $0x130] sm:$0xff] %v626
        %672 = vst [vmem:[%s277 + $0x138] sm:$0xff] %v627
        %673 = vst [vmem:[%s277 + $0x140] sm:$0xff] %v628
        %674 = vst [vmem:[%s277 + $0x148] sm:$0xff] %v629
        %675 = vst [vmem:[%s277 + $0x150] sm:$0xff] %v630
        %676 = vst [vmem:[%s277 + $0x158] sm:$0xff] %v631
        %677 = vst [vmem:[%s277 + $0x160] sm:$0xff] %v632
        %s678 = sand.u32 %s63, 1
        %s679 = scalar_lea.sflag [#allocation4], %s678
        %s680 = sand.u32 %s63, 1
        %s681 = smul.addr %s680, 104
        %s682 = scalar_lea.vmem [#allocation5], %s681
        %s683 = sand.u32 %s29, 1
        %s684 = scalar_lea.sflag [#allocation7], %s683
        %s685 = sand.u32 %s89, 1
        %s686 = smul.addr %s685, 24
        %s687 = scalar_lea.vmem [#allocation6], %s686
        %s688 = sand.u32 %s29, 1
        %s689 = scalar_lea.sflag [#allocation7], %s688
        %s690 = sand.u32 %s115, 1
        %s691 = smul.addr %s690, 960
        %s692 = scalar_lea.vmem [#allocation8], %s691
        %s693 = sand.u32 %s29, 1
        %s694 = scalar_lea.sflag [#allocation10], %s693
        %s695 = sand.u32 %s141, 1
        %s696 = smul.addr %s695, 128
        %s697 = scalar_lea.vmem [#allocation9], %s696
        %s698 = sand.u32 %s29, 1
        %s699 = scalar_lea.sflag [#allocation10], %s698
        %s700 = sand.u32 %s167, 1
        %s701 = smul.addr %s700, 360
        %s702 = scalar_lea.vmem [#allocation11], %s701
        // Predicated region
        $region29: #{tpu_custom_call.1} parent=23 // pred_check
          %p703 = pneg %p73
        $region30: #{tpu_custom_call.1} parent=23 // pred_check_branch
          %705 = sbr.rel (%p703) target = $region32
        $region31: #{tpu_custom_call.1} parent=23 // pred_region
          %s707 = ssub.s32 1664, 1664
          %708 = vsyncadd %s679, %s707
          %s709 = smul.addr %s29, 13
          %s710 = smul.addr %s709, 128
          %s711 = scalar_lea.hbm %s1, %s710
          %s712 = sshll.u32 %s682, 4
          %s713 = int_to_ptr.vmem [resolvable:$true] %s712
          %718 = dma.vmem_to_hbm [thread:$0]  %s713, 1664, %s711, %s679, 128, 128, 8
        $region32: #{tpu_custom_call.1} parent=23 // pred_fallthru
          _
        // Predicated region
        $region33: #{tpu_custom_call.1} parent=23 // pred_check
          %p719 = pneg %p99
        $region34: #{tpu_custom_call.1} parent=23 // pred_check_branch
          %721 = sbr.rel (%p719) target = $region36
        $region35: #{tpu_custom_call.1} parent=23 // pred_region
          %s723 = ssub.s32 384, 384
          %724 = vsyncadd %s684, %s723
          %s725 = smul.addr %s29, 3
          %s726 = smul.addr %s725, 128
          %s727 = scalar_lea.hbm %s2, %s726
          %s728 = sshll.u32 %s687, 4
          %s729 = int_to_ptr.vmem [resolvable:$true] %s728
          %734 = dma.vmem_to_hbm [thread:$0]  %s729, 384, %s727, %s684, 128, 128, 8
        $region36: #{tpu_custom_call.1} parent=23 // pred_fallthru
          _
        // Predicated region
        $region37: #{tpu_custom_call.1} parent=23 // pred_check
          %p735 = pneg %p125
        $region38: #{tpu_custom_call.1} parent=23 // pred_check_branch
          %737 = sbr.rel (%p735) target = $region40
        $region39: #{tpu_custom_call.1} parent=23 // pred_region
          %s739 = ssub.s32 15360, 15360
          %740 = vsyncadd %s689, %s739
          %s741 = smul.addr %s29, 120
          %s742 = smul.addr %s741, 128
          %s743 = scalar_lea.hbm %s3, %s742
          %s744 = sshll.u32 %s692, 4
          %s745 = int_to_ptr.vmem [resolvable:$true] %s744
          %750 = dma.vmem_to_hbm [thread:$0]  %s745, 15360, %s743, %s689, 128, 128, 8
        $region40: #{tpu_custom_call.1} parent=23 // pred_fallthru
          _
        // Predicated region
        $region41: #{tpu_custom_call.1} parent=23 // pred_check
          %p751 = pneg %p151
        $region42: #{tpu_custom_call.1} parent=23 // pred_check_branch
          %753 = sbr.rel (%p751) target = $region44
        $region43: #{tpu_custom_call.1} parent=23 // pred_region
          %s755 = ssub.s32 2048, 2048
          %756 = vsyncadd %s694, %s755
          %s757 = smul.addr %s29, 16
          %s758 = smul.addr %s757, 128
          %s759 = scalar_lea.hbm %s4, %s758
          %s760 = sshll.u32 %s697, 4
          %s761 = int_to_ptr.vmem [resolvable:$true] %s760
          %766 = dma.vmem_to_hbm [thread:$0]  %s761, 2048, %s759, %s694, 128, 128, 8
        $region44: #{tpu_custom_call.1} parent=23 // pred_fallthru
          _
        // Predicated region
        $region45: #{tpu_custom_call.1} parent=23 // pred_check
          %p767 = pneg %p177
        $region46: #{tpu_custom_call.1} parent=23 // pred_check_branch
          %769 = sbr.rel (%p767) target = $region48
        $region47: #{tpu_custom_call.1} parent=23 // pred_region
          %s771 = ssub.s32 5760, 5760
          %772 = vsyncadd %s699, %s771
          %s773 = smul.addr %s29, 45
          %s774 = smul.addr %s773, 128
          %s775 = scalar_lea.hbm %s5, %s774
          %s776 = sshll.u32 %s702, 4
          %s777 = int_to_ptr.vmem [resolvable:$true] %s776
          %782 = dma.vmem_to_hbm [thread:$0]  %s777, 5760, %s775, %s699, 128, 128, 8
        $region48: #{tpu_custom_call.1} parent=23 // pred_fallthru
          _
      $region24: #{tpu_custom_call.1} parent=5 // pred_fallthru
        _
      %p783 = scmp.le.s32.totalorder 2, %s24
      // Predicated region
      $region49: #{tpu_custom_call.1} parent=5 // pred_check
        %p784 = pneg %p783
      $region50: #{tpu_custom_call.1} parent=5 // pred_check_branch
        %786 = sbr.rel (%p784) target = $region52
      $region51: #{tpu_custom_call.1} parent=5 // pred_region
        %s787 = ssub.s32 %s24, 2
        // Predicated region
        $region53: #{tpu_custom_call.1} parent=51 // pred_check
          %p788 = pneg %p79
        $region54: #{tpu_custom_call.1} parent=51 // pred_check_branch
          %790 = sbr.rel (%p788) target = $region56
        $region55: #{tpu_custom_call.1} parent=51 // pred_region
          %s791 = sand.u32 %s64, 1
          %s792 = scalar_lea.sflag [#allocation4], %s791
          %s793 = sand.u32 %s64, 1
          %s794 = smul.addr %s793, 104
          %s795 = scalar_lea.vmem [#allocation5], %s794
          %796 = dma.done %s792, 1664
        $region56: #{tpu_custom_call.1} parent=51 // pred_fallthru
          _
        // Predicated region
        $region57: #{tpu_custom_call.1} parent=51 // pred_check
          %p797 = pneg %p105
        $region58: #{tpu_custom_call.1} parent=51 // pred_check_branch
          %799 = sbr.rel (%p797) target = $region60
        $region59: #{tpu_custom_call.1} parent=51 // pred_region
          %s800 = sand.u32 %s30, 1
          %s801 = scalar_lea.sflag [#allocation7], %s800
          %s802 = sand.u32 %s90, 1
          %s803 = smul.addr %s802, 24
          %s804 = scalar_lea.vmem [#allocation6], %s803
          %805 = dma.done %s801, 384
        $region60: #{tpu_custom_call.1} parent=51 // pred_fallthru
          _
        // Predicated region
        $region61: #{tpu_custom_call.1} parent=51 // pred_check
          %p806 = pneg %p131
        $region62: #{tpu_custom_call.1} parent=51 // pred_check_branch
          %808 = sbr.rel (%p806) target = $region64
        $region63: #{tpu_custom_call.1} parent=51 // pred_region
          %s809 = sand.u32 %s30, 1
          %s810 = scalar_lea.sflag [#allocation7], %s809
          %s811 = sand.u32 %s116, 1
          %s812 = smul.addr %s811, 960
          %s813 = scalar_lea.vmem [#allocation8], %s812
          %814 = dma.done %s810, 15360
        $region64: #{tpu_custom_call.1} parent=51 // pred_fallthru
          _
        // Predicated region
        $region65: #{tpu_custom_call.1} parent=51 // pred_check
          %p815 = pneg %p157
        $region66: #{tpu_custom_call.1} parent=51 // pred_check_branch
          %817 = sbr.rel (%p815) target = $region68
        $region67: #{tpu_custom_call.1} parent=51 // pred_region
          %s818 = sand.u32 %s30, 1
          %s819 = scalar_lea.sflag [#allocation10], %s818
          %s820 = sand.u32 %s142, 1
          %s821 = smul.addr %s820, 128
          %s822 = scalar_lea.vmem [#allocation9], %s821
          %823 = dma.done %s819, 2048
        $region68: #{tpu_custom_call.1} parent=51 // pred_fallthru
          _
        // Predicated region
        $region69: #{tpu_custom_call.1} parent=51 // pred_check
          %p824 = pneg %p183
        $region70: #{tpu_custom_call.1} parent=51 // pred_check_branch
          %826 = sbr.rel (%p824) target = $region72
        $region71: #{tpu_custom_call.1} parent=51 // pred_region
          %s827 = sand.u32 %s30, 1
          %s828 = scalar_lea.sflag [#allocation10], %s827
          %s829 = sand.u32 %s168, 1
          %s830 = smul.addr %s829, 360
          %s831 = scalar_lea.vmem [#allocation11], %s830
          %832 = dma.done %s828, 5760
        $region72: #{tpu_custom_call.1} parent=51 // pred_fallthru
          _
      $region52: #{tpu_custom_call.1} parent=5 // pred_fallthru
        _
    $region6: #{tpu_custom_call.1} parent=1 // loop_footer
      %s28 = sadd.s32 1, %s24
    $region7: #{tpu_custom_call.1} parent=1 // loop_footer_branch
      %23 = sbr.rel target = $region3
    $region8: #{tpu_custom_call.1} parent=1 // loop_exit
      _
    %833 = vsyncpa [#allocation3], 1
    %s834 = scalar_lea.sflag [#allocation3], 1
    %835 = vsyncpa %s834, 1
    %836 = vsyncpa [#allocation4], 1
    %s837 = scalar_lea.sflag [#allocation4], 1
    %838 = vsyncpa %s837, 1
    %839 = vsyncpa [#allocation7], 1
    %s840 = scalar_lea.sflag [#allocation7], 1
    %841 = vsyncpa %s840, 1
    %842 = vsyncpa [#allocation10], 1
    %s843 = scalar_lea.sflag [#allocation10], 1
    %844 = vsyncpa %s843, 1

</llo_original>
